<compile_context>
chip_gen: v6e
topology: v6e:2x2x1
jax: 0.10.0
libtpu: 0.0.40
codegen_flags: <defaults>
</compile_context>

<pallas_src>
import functools
import math

import jax
import jax.numpy as jnp
from jax import lax
from jax.experimental import pallas as pl
from jax.experimental.pallas import tpu as pltpu


_BASE = 8  # dummy slots at the head of the window scratch: keeps every store
           # 8-aligned while the (kh=0, kw=0) tap offset stays non-negative.


def _fpn_output_kernel(xm_ref, xa_ref, xb_ref, w_ref, out_ref, xw_ref, *,
                       tile_h, width):
    """One (batch, row-tile) step of the folded 3x3 conv.

    xm_ref:  (1, tile_h, W, Cin) f32   main input rows of this tile
    xa_ref:  (1, 1, W, Cin)      f32   row just above the tile (clamped index)
    xb_ref:  (1, 1, W, Cin)      f32   row just below the tile (clamped index)
    w_ref:   (9, Cin, Cpad)            folded 3x3 weights, tap-major (kh*3+kw)
    out_ref: (1, tile_h, W, Cpad)
    xw_ref:  (_BASE + (tile_h+2)*W + 8, Cin)  flattened working window
    """
    t = pl.program_id(1)
    n_ht = pl.num_programs(1)
    cin = xm_ref.shape[-1]
    cpad = w_ref.shape[-1]
    nflat = tile_h * width
    cd = xw_ref.dtype

    # Halo rows: clamped by the index_map, zeroed here at the image border.
    # This is where the conv's H zero-padding happens (no pre-padded input).
    top_mask = (t > 0).astype(cd)
    bot_mask = (t < n_ht - 1).astype(cd)
    above = xa_ref[0, 0].astype(cd) * top_mask
    below = xb_ref[0, 0].astype(cd) * bot_mask

    # Assemble the flattened (row stride = W) working window:
    #   row 0 = halo above, rows 1..tile_h = main tile, row tile_h+1 = below.
    xw_ref[pl.ds(_BASE, width)] = above
    xw_ref[pl.ds(_BASE + width, nflat)] = (
        xm_ref[0].astype(cd).reshape(nflat, cin))
    xw_ref[pl.ds(_BASE + (tile_h + 1) * width, width)] = below

    # Nine tap matmuls on contiguous shifted slabs, accumulated as an f32
    # value (no scratch-accumulator RMW).  The kw shift is folded into the
    # flat offset; wrapped / uninitialised contributions land only in output
    # columns 0 and W-1, which the wrapper recomputes exactly.
    acc = None
    for kh in range(3):
        for kw in range(3):
            start = _BASE + kh * width + (kw - 1)
            slab = xw_ref[pl.ds(start, nflat), :]
            tap = jnp.dot(slab, w_ref[kh * 3 + kw],
                          preferred_element_type=jnp.float32)
            acc = tap if acc is None else acc + tap

    # Lane-dense store: full W rows, Cpad (multiple of 128) channels.
    out_ref[0] = acc.reshape(tile_h, width, cpad).astype(out_ref.dtype)


def _vmem_capacity_bytes(default=64 * 1024 * 1024):
    """Per-core VMEM capacity (falls back to the v7x 64 MiB lower bound)."""
    try:
        info = pltpu.get_tpu_info()
    except Exception:
        return default
    for name in ("vmem_capacity_bytes", "vmem_size_bytes", "vmem_bytes"):
        val = getattr(info, name, None)
        if isinstance(val, int) and val > 0:
            return val
    return default


def _pick_tile_h(ho, width, cin, cpad, cd_bytes, out_bytes, n_batch,
                 budget_bytes):
    """Largest divisor of Ho whose per-step footprint fits the budget, with a
    mild preference for an even total step count (megacore balance)."""
    cands = []
    for t in range(1, ho + 1):
        if ho % t:
            continue
        fp = (2 * t * width * cin * 4                       # main input, x2 buf
              + 8 * width * cin * 4                         # halo rows, x2 buf
              + 2 * 9 * cin * cpad * cd_bytes               # folded weights
              + (_BASE + (t + 2) * width + 8) * cin * cd_bytes  # window scratch
              + t * width * cpad * 4                        # f32 accumulator
              + 2 * t * width * cpad * out_bytes)           # output, x2 buf
        if fp <= budget_bytes:
            cands.append(t)
    if not cands:
        return 1
    best = max(cands)
    if (n_batch * (ho // best)) % 2:
        even = [c for c in cands
                if (n_batch * (ho // c)) % 2 == 0 and 2 * c >= best]
        if even:
            best = max(even)
    return best


def fpn_output_nhwc(x_nhwc, w3_oihw, w1_oihw, *, compute_dtype=jnp.bfloat16,
                    out_dtype=jnp.float32, tile_h=None):
    """Fused FPNOutput forward.  x_nhwc: (N,H,W,Cin) f32 -> (N,H,W,n_classes)."""
    n, h, w, cin = x_nhwc.shape
    cmid, cin_w, ksh, ksw = w3_oihw.shape
    assert (cin_w, ksh, ksw) == (cin, 3, 3)
    ncls, cmid_w, k1h, k1w = w1_oihw.shape
    assert (cmid_w, k1h, k1w) == (cmid, 1, 1)
    assert w >= 2, "kernel assumes W >= 2"

    cd = jnp.dtype(compute_dtype)
    od = jnp.dtype(out_dtype)

    # Fold the 1x1 conv_out into the 3x3 conv (both linear, bias-free, no
    # BN/activation between them when norm_layer=None) -> one 3x3 conv.
    w_eff_hwio = jnp.einsum(
        "miuv,om->uvio", w3_oihw.astype(jnp.float32),
        w1_oihw[:, :, 0, 0].astype(jnp.float32),
        precision=lax.Precision.HIGHEST)                     # (3,3,Cin,ncls)

    # Lane-dense output: zero-pad the class dim to a multiple of 128.
    cpad = max(128, ((ncls + 127) // 128) * 128)
    w_eff_pad = jnp.zeros((3, 3, cin, cpad), jnp.float32)
    w_eff_pad = w_eff_pad.at[..., :ncls].set(w_eff_hwio)
    w_k = w_eff_pad.reshape(9, cin, cpad).astype(cd)

    vmem_cap = _vmem_capacity_bytes()
    if tile_h is None:
        tile_h = _pick_tile_h(h, w, cin, cpad, cd.itemsize, od.itemsize, n,
                              budget_bytes=int(0.30 * vmem_cap))
    if h % tile_h:
        raise ValueError(f"tile_h={tile_h} must divide height {h}")
    n_ht = h // tile_h

    kernel = functools.partial(_fpn_output_kernel, tile_h=tile_h, width=w)
    scratch_len = _BASE + (tile_h + 2) * w + 8

    flops = 2 * n * h * w * 9 * cin * cpad
    bytes_accessed = (x_nhwc.size * 4 + w_k.size * cd.itemsize
                      + n * h * w * cpad * od.itemsize)

    out_full = pl.pallas_call(
        kernel,
        out_shape=jax.ShapeDtypeStruct((n, h, w, cpad), od),
        grid_spec=pltpu.PrefetchScalarGridSpec(
            num_scalar_prefetch=0,
            grid=(n, n_ht),
            in_specs=[
                # main rows of this tile
                pl.BlockSpec((1, tile_h, w, cin), lambda b, t: (b, t, 0, 0)),
                # 1-row halos just above / below (clamped; zeroed in-kernel)
                pl.BlockSpec((1, 1, w, cin),
                             lambda b, t: (b, jnp.maximum(t * tile_h - 1, 0),
                                           0, 0)),
                pl.BlockSpec((1, 1, w, cin),
                             lambda b, t: (b, jnp.minimum((t + 1) * tile_h,
                                                          h - 1), 0, 0)),
                # folded weights: constant block index -> resident in VMEM
                pl.BlockSpec((9, cin, cpad), lambda b, t: (0, 0, 0)),
            ],
            out_specs=pl.BlockSpec((1, tile_h, w, cpad),
                                   lambda b, t: (b, t, 0, 0)),
            scratch_shapes=[pltpu.VMEM((scratch_len, cin), cd)]),
        compiler_params=pltpu.CompilerParams(
            dimension_semantics=("parallel", "parallel"),
            vmem_limit_bytes=int(min(0.75 * vmem_cap, 100 * 2 ** 20))),
        cost_estimate=pl.CostEstimate(flops=int(flops), transcendentals=0,
                                      bytes_accessed=int(bytes_accessed)),
    )(x_nhwc, x_nhwc, x_nhwc, w_k)

    out = out_full[..., :ncls]

    # The kernel computes output columns 0 and W-1 with wrapped (not zero)
    # left/right neighbours; recompute exactly those two columns with a tiny
    # lax conv on 2-pixel-wide input slivers (negligible extra HBM traffic).
    dn = ("NHWC", "HWIO", "NHWC")
    left = lax.conv_general_dilated(
        x_nhwc[:, :, :2, :], w_eff_hwio, (1, 1), ((1, 1), (1, 0)),
        dimension_numbers=dn, precision=lax.Precision.HIGHEST)
    right = lax.conv_general_dilated(
        x_nhwc[:, :, w - 2:, :], w_eff_hwio, (1, 1), ((1, 1), (0, 1)),
        dimension_numbers=dn, precision=lax.Precision.HIGHEST)
    out = jnp.concatenate(
        [left.astype(od), out[:, :, 1:w - 1, :], right.astype(od)], axis=2)
    return out


def fpn_output_nchw(x_nchw, w3_oihw, w1_oihw, **kw):
    """PyTorch-layout convenience wrapper (adds two layout passes)."""
    out = fpn_output_nhwc(jnp.transpose(x_nchw, (0, 2, 3, 1)),
                          w3_oihw, w1_oihw, **kw)
    return jnp.transpose(out, (0, 3, 1, 2))


def kaiming_normal_oihw(key, out_chan, in_chan, ks, a=1.0):
    """nn.init.kaiming_normal_(w, a): std = sqrt(2/(1+a^2)) / sqrt(fan_in)."""
    fan_in = in_chan * ks * ks
    std = math.sqrt(2.0 / (1.0 + a * a)) / math.sqrt(fan_in)
    return std * jax.random.normal(key, (out_chan, in_chan, ks, ks),
                                   jnp.float32)


def _reference_f32(x_nhwc, w3_oihw, w1_oihw):
    """Unfolded two-conv reference (conv 3x3 then conv_out 1x1), f32."""
    w3_hwio = jnp.transpose(w3_oihw, (2, 3, 1, 0))
    mid = lax.conv_general_dilated(
        x_nhwc, w3_hwio, window_strides=(1, 1), padding=((1, 1), (1, 1)),
        dimension_numbers=("NHWC", "HWIO", "NHWC"),
        precision=lax.Precision.HIGHEST)
    w1m = jnp.transpose(w1_oihw[:, :, 0, 0], (1, 0))
    return jnp.einsum("nhwc,cd->nhwd", mid, w1m,
                      precision=lax.Precision.HIGHEST)


if __name__ == "__main__":
    key = jax.random.PRNGKey(0)
    kx, k3, k1 = jax.random.split(key, 3)

    # FPNOutput(in_chan=4, mid_chan=32, n_classes=8), x = (2, 4, 16, 16) NCHW.
    N, Cin, H, W = 2, 4, 16, 16
    Cmid, n_classes = 32, 8

    x_nchw = jax.random.normal(kx, (N, Cin, H, W), jnp.float32)
    w3 = kaiming_normal_oihw(k3, Cmid, Cin, 3, a=1.0)        # conv.conv.weight
    w1 = kaiming_normal_oihw(k1, n_classes, Cmid, 1, a=1.0)  # conv_out.weight

    # The Pallas path is NHWC-native (channels lane-dense); convert once here.
    x_nhwc = jnp.transpose(x_nchw, (0, 2, 3, 1))
    ref = _reference_f32(x_nhwc, w3, w1)

    # 1) f32 compute path with a forced multi-row-tile grid to exercise the
    #    halo / boundary logic on interior and edge tiles.
    out_f32 = jax.block_until_ready(
        fpn_output_nhwc(x_nhwc, w3, w1, compute_dtype=jnp.float32, tile_h=4))
    assert out_f32.shape == (N, H, W, n_classes)
    assert jnp.allclose(out_f32, ref, atol=1e-2, rtol=1e-2), \
        "f32 path mismatch vs lax reference"

    # 2) Default bf16-MXU path, auto tile-height selection.
    out_bf16 = jax.block_until_ready(fpn_output_nhwc(x_nhwc, w3, w1))
    assert out_bf16.shape == (N, H, W, n_classes)
    assert jnp.allclose(out_bf16, ref, atol=1e-1, rtol=1e-1), \
        "bf16 path mismatch vs f32 lax reference"

    print("KERNEL_OK")
</pallas_src>

<mosaic_0001>
module attributes {stable_mosaic.version = 11 : i64} {
  func.func @_fpn_output_kernel(%arg0: i32, %arg1: i32, %arg2: memref<1x4x16x4xf32, #tpu.memory_space<vmem>>, %arg3: memref<1x1x16x4xf32, #tpu.memory_space<vmem>>, %arg4: memref<1x1x16x4xf32, #tpu.memory_space<vmem>>, %arg5: memref<9x4x128xf32, #tpu.memory_space<vmem>>, %arg6: memref<1x4x16x128xf32, #tpu.memory_space<vmem>>, %arg7: memref<112x4xf32, #tpu.memory_space<vmem>>) attributes {dimension_semantics = [#tpu.dimension_semantics<parallel>, #tpu.dimension_semantics<parallel>], iteration_bounds = array<i64: 2, 4>, scalar_prefetch = 0 : i64, scratch_operands = 1 : i64, tpu.core_type = #tpu.core_type<tc>, window_params = [{transform_indices = @transform_0, window_bounds = array<i64: 1, 4, 16, 4>}, {transform_indices = @transform_1, window_bounds = array<i64: 1, 1, 16, 4>}, {transform_indices = @transform_2, window_bounds = array<i64: 1, 1, 16, 4>}, {pipeline_mode = #tpu.pipeline_mode<synchronous>, transform_indices = @transform_3, window_bounds = array<i64: 9, 4, 128>}, {transform_indices = @transform_4, window_bounds = array<i64: 1, 4, 16, 128>}]} {
    %c0_i32 = arith.constant 0 : i32
    %0 = arith.cmpi sgt, %arg1, %c0_i32 : i32
    %1 = arith.extui %0 : i1 to i32
    %2 = arith.sitofp %1 : i32 to f32
    %c3_i32 = arith.constant 3 : i32
    %3 = arith.cmpi slt, %arg1, %c3_i32 : i32
    %4 = arith.extui %3 : i1 to i32
    %5 = arith.sitofp %4 : i32 to f32
    %c0 = arith.constant 0 : index
    %c0_0 = arith.constant 0 : index
    %c0_1 = arith.constant 0 : index
    %c0_2 = arith.constant 0 : index
    %6 = vector.load %arg3[%c0, %c0_0, %c0_1, %c0_2] : memref<1x1x16x4xf32, #tpu.memory_space<vmem>>, vector<1x1x16x4xf32>
    %7 = vector.shape_cast %6 : vector<1x1x16x4xf32> to vector<16x4xf32>
    %8 = vector.broadcast %2 : f32 to vector<16x4xf32>
    %9 = arith.mulf %7, %8 : vector<16x4xf32>
    %c0_3 = arith.constant 0 : index
    %c0_4 = arith.constant 0 : index
    %c0_5 = arith.constant 0 : index
    %c0_6 = arith.constant 0 : index
    %10 = vector.load %arg4[%c0_3, %c0_4, %c0_5, %c0_6] : memref<1x1x16x4xf32, #tpu.memory_space<vmem>>, vector<1x1x16x4xf32>
    %11 = vector.shape_cast %10 : vector<1x1x16x4xf32> to vector<16x4xf32>
    %12 = vector.broadcast %5 : f32 to vector<16x4xf32>
    %13 = arith.mulf %11, %12 : vector<16x4xf32>
    %c8 = arith.constant 8 : index
    %c0_7 = arith.constant 0 : index
    %14 = vector.load %arg7[%c8, %c0_7] : memref<112x4xf32, #tpu.memory_space<vmem>>, vector<16x4xf32>
    tpu.vector_store %arg7[%c8, %c0_7], %9 {strides = array<i32>} : memref<112x4xf32, #tpu.memory_space<vmem>>, vector<16x4xf32>,
    %c0_8 = arith.constant 0 : index
    %c0_9 = arith.constant 0 : index
    %c0_10 = arith.constant 0 : index
    %c0_11 = arith.constant 0 : index
    %15 = vector.load %arg2[%c0_8, %c0_9, %c0_10, %c0_11] : memref<1x4x16x4xf32, #tpu.memory_space<vmem>>, vector<1x4x16x4xf32>
    %16 = vector.shape_cast %15 : vector<1x4x16x4xf32> to vector<4x16x4xf32>
    %17 = vector.shape_cast %16 : vector<4x16x4xf32> to vector<64x4xf32>
    %c24 = arith.constant 24 : index
    %c0_12 = arith.constant 0 : index
    %18 = vector.load %arg7[%c24, %c0_12] : memref<112x4xf32, #tpu.memory_space<vmem>>, vector<64x4xf32>
    tpu.vector_store %arg7[%c24, %c0_12], %17 {strides = array<i32>} : memref<112x4xf32, #tpu.memory_space<vmem>>, vector<64x4xf32>,
    %c88 = arith.constant 88 : index
    %c0_13 = arith.constant 0 : index
    %19 = vector.load %arg7[%c88, %c0_13] : memref<112x4xf32, #tpu.memory_space<vmem>>, vector<16x4xf32>
    tpu.vector_store %arg7[%c88, %c0_13], %13 {strides = array<i32>} : memref<112x4xf32, #tpu.memory_space<vmem>>, vector<16x4xf32>,
    %c7 = arith.constant 7 : index
    %c0_14 = arith.constant 0 : index
    %20 = vector.load %arg7[%c7, %c0_14] : memref<112x4xf32, #tpu.memory_space<vmem>>, vector<64x4xf32>
    %c0_15 = arith.constant 0 : index
    %c0_16 = arith.constant 0 : index
    %c0_17 = arith.constant 0 : index
    %21 = vector.load %arg5[%c0_15, %c0_16, %c0_17] : memref<9x4x128xf32, #tpu.memory_space<vmem>>, vector<1x4x128xf32>
    %22 = vector.shape_cast %21 : vector<1x4x128xf32> to vector<4x128xf32>
    %cst = arith.constant dense<0.000000e+00> : vector<64x128xf32>
    %23 = tpu.matmul %20, %22, %cst {dimension_numbers = #tpu.dot_dimension_numbers<[1], [0], [0], [1], [0, 0, 1, 1], [], []>} : vector<64x4xf32>, vector<4x128xf32>, vector<64x128xf32> -> vector<64x128xf32>
    %c8_18 = arith.constant 8 : index
    %c0_19 = arith.constant 0 : index
    %24 = vector.load %arg7[%c8_18, %c0_19] : memref<112x4xf32, #tpu.memory_space<vmem>>, vector<64x4xf32>
    %c1 = arith.constant 1 : index
    %c0_20 = arith.constant 0 : index
    %c0_21 = arith.constant 0 : index
    %25 = vector.load %arg5[%c1, %c0_20, %c0_21] : memref<9x4x128xf32, #tpu.memory_space<vmem>>, vector<1x4x128xf32>
    %26 = vector.shape_cast %25 : vector<1x4x128xf32> to vector<4x128xf32>
    %cst_22 = arith.constant dense<0.000000e+00> : vector<64x128xf32>
    %27 = tpu.matmul %24, %26, %cst_22 {dimension_numbers = #tpu.dot_dimension_numbers<[1], [0], [0], [1], [0, 0, 1, 1], [], []>} : vector<64x4xf32>, vector<4x128xf32>, vector<64x128xf32> -> vector<64x128xf32>
    %28 = arith.addf %23, %27 : vector<64x128xf32>
    %c9 = arith.constant 9 : index
    %c0_23 = arith.constant 0 : index
    %29 = vector.load %arg7[%c9, %c0_23] : memref<112x4xf32, #tpu.memory_space<vmem>>, vector<64x4xf32>
    %c2 = arith.constant 2 : index
    %c0_24 = arith.constant 0 : index
    %c0_25 = arith.constant 0 : index
    %30 = vector.load %arg5[%c2, %c0_24, %c0_25] : memref<9x4x128xf32, #tpu.memory_space<vmem>>, vector<1x4x128xf32>
    %31 = vector.shape_cast %30 : vector<1x4x128xf32> to vector<4x128xf32>
    %cst_26 = arith.constant dense<0.000000e+00> : vector<64x128xf32>
    %32 = tpu.matmul %29, %31, %cst_26 {dimension_numbers = #tpu.dot_dimension_numbers<[1], [0], [0], [1], [0, 0, 1, 1], [], []>} : vector<64x4xf32>, vector<4x128xf32>, vector<64x128xf32> -> vector<64x128xf32>
    %33 = arith.addf %28, %32 : vector<64x128xf32>
    %c23 = arith.constant 23 : index
    %c0_27 = arith.constant 0 : index
    %34 = vector.load %arg7[%c23, %c0_27] : memref<112x4xf32, #tpu.memory_space<vmem>>, vector<64x4xf32>
    %c3 = arith.constant 3 : index
    %c0_28 = arith.constant 0 : index
    %c0_29 = arith.constant 0 : index
    %35 = vector.load %arg5[%c3, %c0_28, %c0_29] : memref<9x4x128xf32, #tpu.memory_space<vmem>>, vector<1x4x128xf32>
    %36 = vector.shape_cast %35 : vector<1x4x128xf32> to vector<4x128xf32>
    %cst_30 = arith.constant dense<0.000000e+00> : vector<64x128xf32>
    %37 = tpu.matmul %34, %36, %cst_30 {dimension_numbers = #tpu.dot_dimension_numbers<[1], [0], [0], [1], [0, 0, 1, 1], [], []>} : vector<64x4xf32>, vector<4x128xf32>, vector<64x128xf32> -> vector<64x128xf32>
    %38 = arith.addf %33, %37 : vector<64x128xf32>
    %c24_31 = arith.constant 24 : index
    %c0_32 = arith.constant 0 : index
    %39 = vector.load %arg7[%c24_31, %c0_32] : memref<112x4xf32, #tpu.memory_space<vmem>>, vector<64x4xf32>
    %c4 = arith.constant 4 : index
    %c0_33 = arith.constant 0 : index
    %c0_34 = arith.constant 0 : index
    %40 = vector.load %arg5[%c4, %c0_33, %c0_34] : memref<9x4x128xf32, #tpu.memory_space<vmem>>, vector<1x4x128xf32>
    %41 = vector.shape_cast %40 : vector<1x4x128xf32> to vector<4x128xf32>
    %cst_35 = arith.constant dense<0.000000e+00> : vector<64x128xf32>
    %42 = tpu.matmul %39, %41, %cst_35 {dimension_numbers = #tpu.dot_dimension_numbers<[1], [0], [0], [1], [0, 0, 1, 1], [], []>} : vector<64x4xf32>, vector<4x128xf32>, vector<64x128xf32> -> vector<64x128xf32>
    %43 = arith.addf %38, %42 : vector<64x128xf32>
    %c25 = arith.constant 25 : index
    %c0_36 = arith.constant 0 : index
    %44 = vector.load %arg7[%c25, %c0_36] : memref<112x4xf32, #tpu.memory_space<vmem>>, vector<64x4xf32>
    %c5 = arith.constant 5 : index
    %c0_37 = arith.constant 0 : index
    %c0_38 = arith.constant 0 : index
    %45 = vector.load %arg5[%c5, %c0_37, %c0_38] : memref<9x4x128xf32, #tpu.memory_space<vmem>>, vector<1x4x128xf32>
    %46 = vector.shape_cast %45 : vector<1x4x128xf32> to vector<4x128xf32>
    %cst_39 = arith.constant dense<0.000000e+00> : vector<64x128xf32>
    %47 = tpu.matmul %44, %46, %cst_39 {dimension_numbers = #tpu.dot_dimension_numbers<[1], [0], [0], [1], [0, 0, 1, 1], [], []>} : vector<64x4xf32>, vector<4x128xf32>, vector<64x128xf32> -> vector<64x128xf32>
    %48 = arith.addf %43, %47 : vector<64x128xf32>
    %c39 = arith.constant 39 : index
    %c0_40 = arith.constant 0 : index
    %49 = vector.load %arg7[%c39, %c0_40] : memref<112x4xf32, #tpu.memory_space<vmem>>, vector<64x4xf32>
    %c6 = arith.constant 6 : index
    %c0_41 = arith.constant 0 : index
    %c0_42 = arith.constant 0 : index
    %50 = vector.load %arg5[%c6, %c0_41, %c0_42] : memref<9x4x128xf32, #tpu.memory_space<vmem>>, vector<1x4x128xf32>
    %51 = vector.shape_cast %50 : vector<1x4x128xf32> to vector<4x128xf32>
    %cst_43 = arith.constant dense<0.000000e+00> : vector<64x128xf32>
    %52 = tpu.matmul %49, %51, %cst_43 {dimension_numbers = #tpu.dot_dimension_numbers<[1], [0], [0], [1], [0, 0, 1, 1], [], []>} : vector<64x4xf32>, vector<4x128xf32>, vector<64x128xf32> -> vector<64x128xf32>
    %53 = arith.addf %48, %52 : vector<64x128xf32>
    %c40 = arith.constant 40 : index
    %c0_44 = arith.constant 0 : index
    %54 = vector.load %arg7[%c40, %c0_44] : memref<112x4xf32, #tpu.memory_space<vmem>>, vector<64x4xf32>
    %c7_45 = arith.constant 7 : index
    %c0_46 = arith.constant 0 : index
    %c0_47 = arith.constant 0 : index
    %55 = vector.load %arg5[%c7_45, %c0_46, %c0_47] : memref<9x4x128xf32, #tpu.memory_space<vmem>>, vector<1x4x128xf32>
    %56 = vector.shape_cast %55 : vector<1x4x128xf32> to vector<4x128xf32>
    %cst_48 = arith.constant dense<0.000000e+00> : vector<64x128xf32>
    %57 = tpu.matmul %54, %56, %cst_48 {dimension_numbers = #tpu.dot_dimension_numbers<[1], [0], [0], [1], [0, 0, 1, 1], [], []>} : vector<64x4xf32>, vector<4x128xf32>, vector<64x128xf32> -> vector<64x128xf32>
    %58 = arith.addf %53, %57 : vector<64x128xf32>
    %c41 = arith.constant 41 : index
    %c0_49 = arith.constant 0 : index
    %59 = vector.load %arg7[%c41, %c0_49] : memref<112x4xf32, #tpu.memory_space<vmem>>, vector<64x4xf32>
    %c8_50 = arith.constant 8 : index
    %c0_51 = arith.constant 0 : index
    %c0_52 = arith.constant 0 : index
    %60 = vector.load %arg5[%c8_50, %c0_51, %c0_52] : memref<9x4x128xf32, #tpu.memory_space<vmem>>, vector<1x4x128xf32>
    %61 = vector.shape_cast %60 : vector<1x4x128xf32> to vector<4x128xf32>
    %cst_53 = arith.constant dense<0.000000e+00> : vector<64x128xf32>
    %62 = tpu.matmul %59, %61, %cst_53 {dimension_numbers = #tpu.dot_dimension_numbers<[1], [0], [0], [1], [0, 0, 1, 1], [], []>} : vector<64x4xf32>, vector<4x128xf32>, vector<64x128xf32> -> vector<64x128xf32>
    %63 = arith.addf %58, %62 : vector<64x128xf32>
    %64 = vector.shape_cast %63 : vector<64x128xf32> to vector<4x16x128xf32>
    %c0_54 = arith.constant 0 : index
    %c0_55 = arith.constant 0 : index
    %c0_56 = arith.constant 0 : index
    %c0_57 = arith.constant 0 : index
    %65 = vector.load %arg6[%c0_54, %c0_55, %c0_56, %c0_57] : memref<1x4x16x128xf32, #tpu.memory_space<vmem>>, vector<1x4x16x128xf32>
    %66 = vector.shape_cast %65 : vector<1x4x16x128xf32> to vector<4x16x128xf32>
    %67 = vector.shape_cast %64 : vector<4x16x128xf32> to vector<1x4x16x128xf32>
    tpu.vector_store %arg6[%c0_54, %c0_55, %c0_56, %c0_57], %67 {strides = array<i32>} : memref<1x4x16x128xf32, #tpu.memory_space<vmem>>, vector<1x4x16x128xf32>,
    return
  }
  func.func @transform_0(%arg0: i32, %arg1: i32) -> (i32, i32, i32, i32) {
    %c0_i32 = arith.constant 0 : i32
    %c0_i32_0 = arith.constant 0 : i32
    %c0_i32_1 = arith.constant 0 : i32
    return %arg0, %arg1, %c0_i32, %c0_i32_0 : i32, i32, i32, i32
  }
  func.func @transform_1(%arg0: i32, %arg1: i32) -> (i32, i32, i32, i32) {
    %c4_i32 = arith.constant 4 : i32
    %0 = arith.muli %arg1, %c4_i32 : i32
    %c1_i32 = arith.constant 1 : i32
    %1 = arith.subi %0, %c1_i32 : i32
    %c0_i32 = arith.constant 0 : i32
    %2 = arith.maxsi %1, %c0_i32 : i32
    %c0_i32_0 = arith.constant 0 : i32
    %c0_i32_1 = arith.constant 0 : i32
    %c0_i32_2 = arith.constant 0 : i32
    return %arg0, %2, %c0_i32_0, %c0_i32_1 : i32, i32, i32, i32
  }
  func.func @transform_2(%arg0: i32, %arg1: i32) -> (i32, i32, i32, i32) {
    %c1_i32 = arith.constant 1 : i32
    %0 = arith.addi %arg1, %c1_i32 : i32
    %c4_i32 = arith.constant 4 : i32
    %1 = arith.muli %0, %c4_i32 : i32
    %c15_i32 = arith.constant 15 : i32
    %2 = arith.minsi %1, %c15_i32 : i32
    %c0_i32 = arith.constant 0 : i32
    %c0_i32_0 = arith.constant 0 : i32
    %c0_i32_1 = arith.constant 0 : i32
    return %arg0, %2, %c0_i32, %c0_i32_0 : i32, i32, i32, i32
  }
  func.func @transform_3(%arg0: i32, %arg1: i32) -> (i32, i32, i32) {
    %c0_i32 = arith.constant 0 : i32
    %c0_i32_0 = arith.constant 0 : i32
    %c0_i32_1 = arith.constant 0 : i32
    %c0_i32_2 = arith.constant 0 : i32
    return %c0_i32, %c0_i32_0, %c0_i32_1 : i32, i32, i32
  }
  func.func @transform_4(%arg0: i32, %arg1: i32) -> (i32, i32, i32, i32) {
    %c0_i32 = arith.constant 0 : i32
    %c0_i32_0 = arith.constant 0 : i32
    %c0_i32_1 = arith.constant 0 : i32
    return %arg0, %arg1, %c0_i32, %c0_i32_0 : i32, i32, i32, i32
  }
}

</mosaic_0001>

<llo_original>
// kernel: tpu_custom_call.1
$region0: #{tpu_custom_call.1}
  #allocation0 [shape = 'u32[]', space=smem, size = 0x4, offset = 0x4, fixed_abs, tag = 'smem constant byte address 0x4 - core index']
  #allocation1 [shape = 'u32[144,128]{1,0:T(1,128)}', space=vmem, size = 0x12000, scoped, tag = 'internal scratch']
  #allocation2 [shape = 'f32[112,4]{1,0:T(8,128)}', space=vmem, size = 0xe000, scoped, tag = 'scratch operand']
  %s0 = inlined_call_operand.vmem [shape: f32[2,16,16,4], index: 0, kind: input, shape index: {}]
  %s1 = inlined_call_operand.vmem [shape: f32[2,16,16,4], index: 1, kind: input, shape index: {}]
  %s2 = inlined_call_operand.vmem [shape: f32[2,16,16,4], index: 2, kind: input, shape index: {}]
  %s3 = inlined_call_operand.vmem [shape: f32[9,4,128], index: 3, kind: input, shape index: {}]
  %s4 = inlined_call_operand.hbm [shape: f32[2,16,16,128], index: 4, kind: output, shape index: {}]
  %s5 = sld [smem:[#allocation0]]
  $region49: #{tpu_custom_call.1} parent=0
    _
  %s7 = ssub.s32 1, %s5
  %s8 = scalar_select 0, %s7, %s5
  $region1: #{tpu_custom_call.1} parent=0
    #allocation3 [shape = 'u8[65536]{0}', space=vmem, size = 0x10000, scoped, tag = 'output window, operand 0']
    #allocation4 [shape = 's32[2]{0}', space=sflag, size = 0x8, scoped, tag = 'scoped memory for tpu_custom_call.1']
    %9 = vsyncpa [#allocation4], 0
    %s10 = scalar_lea.sflag [#allocation4], 1
    %11 = vsyncpa %s10, 0
    loop: start=0, step=1, limit=10
    $region2: #{tpu_custom_call.1} parent=1 // loop_pre_header
      _
    $region3: #{tpu_custom_call.1} parent=1 // loop_header
      %s13 = sphi 0, %s17
      %p14 = scmp.ge.s32.totalorder %s13, 10
      %s20 = sphi 0, %s32
      %s21 = sphi 0, %s28
      %s22 = sphi 0, %s20
      %s23 = sphi 0, %s21
      %s24 = sphi 0, %s22
      %s25 = sphi 0, %s23
      %s37 = sphi 0, %s39
      %s40 = sphi 0, %s37
      %s41 = sphi 0, %s40
      %s57 = sphi 0, %s41
      %s73 = sphi 0, %s75
      %s76 = sphi 0, %s73
      %s77 = sphi 0, %s76
      %s93 = sphi 0, %s77
      %s109 = sphi 0, %s111
      %s112 = sphi 0, %s109
      %s113 = sphi 0, %s112
      %s129 = sphi 0, %s113
      %s133 = sphi 0, %s133
      %s135 = sphi 0, %s133
      %s136 = sphi 0, %s135
      %s150 = sphi 0, %s136
      %s158 = sphi 0, %s160
      %s161 = sphi 0, %s158
      %s162 = sphi 0, %s161
      %s178 = sphi 0, %s162
    $region4: #{tpu_custom_call.1} parent=1 // loop_header_branch
      %16 = sbr.rel (%p14) target = $region8
    $region5: #{tpu_custom_call.1} parent=1 // loop_body
      %s18 = ssub.s32 %s13, 1
      %s19 = ssub.s32 %s13, 2
      %s26 = sadd.s32 1, %s21
      %p27 = scmp.ge.s32.totalorder %s26, 4
      %s28 = scalar_select %p27, 0, %s26
      %s29 = sadd.s32 1, %s20
      %s30 = scalar_select %p27, %s29, %s20
      %p31 = scmp.ge.s32.totalorder %s30, 2
      %s32 = scalar_select %p31, 0, %s30
      %s33 = ssub.s32 %s20, %s32
      %s34 = ssub.s32 %s21, %s28
      %s35 = sor.u32 %s33, %s34
      %p36 = scmp.eq.s32.totalorder %s35, 0
      %s38 = sadd.s32 %s37, 1
      %s39 = scalar_select %p36, %s37, %s38
      %p42 = pneg %p36
      %p43 = scmp.eq.s32.totalorder %s13, 7
      %p44 = por %p42, %p43
      %p45 = scmp.ne.s32.totalorder %s37, %s40
      %p46 = scmp.eq.s32.totalorder %s13, 0
      %p47 = por %p45, %p46
      %p48 = scmp.ne.s32.totalorder %s37, %s40
      %p49 = scmp.eq.s32.totalorder %s18, 7
      %p50 = por %p48, %p49
      %p51 = scmp.ne.s32.totalorder %s40, %s41
      %p52 = scmp.eq.s32.totalorder %s18, 0
      %p53 = por %p51, %p52
      %p54 = scmp.ne.s32.totalorder %s40, %s41
      %p55 = scmp.eq.s32.totalorder %s19, 7
      %p56 = por %p54, %p55
      %p58 = scmp.ne.s32.totalorder %s41, %s57
      %p59 = scmp.eq.s32.totalorder %s19, 0
      %p60 = por %p58, %p59
      %s61 = smul.u32 %s21, 4
      %s62 = ssub.s32 %s61, 1
      %p63 = scmp.gt.s32.totalorder %s62, 0
      %s64 = scalar_select %p63, %s62, 0
      %s65 = smul.u32 %s28, 4
      %s66 = ssub.s32 %s65, 1
      %p67 = scmp.gt.s32.totalorder %s66, 0
      %s68 = scalar_select %p67, %s66, 0
      %s69 = ssub.s32 %s20, %s32
      %s70 = ssub.s32 %s64, %s68
      %s71 = sor.u32 %s69, %s70
      %p72 = scmp.eq.s32.totalorder %s71, 0
      %s74 = sadd.s32 %s73, 1
      %s75 = scalar_select %p72, %s73, %s74
      %p78 = pneg %p72
      %p79 = scmp.eq.s32.totalorder %s13, 7
      %p80 = por %p78, %p79
      %p81 = scmp.ne.s32.totalorder %s73, %s76
      %p82 = scmp.eq.s32.totalorder %s13, 0
      %p83 = por %p81, %p82
      %p84 = scmp.ne.s32.totalorder %s73, %s76
      %p85 = scmp.eq.s32.totalorder %s18, 7
      %p86 = por %p84, %p85
      %p87 = scmp.ne.s32.totalorder %s76, %s77
      %p88 = scmp.eq.s32.totalorder %s18, 0
      %p89 = por %p87, %p88
      %p90 = scmp.ne.s32.totalorder %s76, %s77
      %p91 = scmp.eq.s32.totalorder %s19, 7
      %p92 = por %p90, %p91
      %p94 = scmp.ne.s32.totalorder %s77, %s93
      %p95 = scmp.eq.s32.totalorder %s19, 0
      %p96 = por %p94, %p95
      %s97 = sadd.s32 %s21, 1
      %s98 = smul.u32 %s97, 4
      %p99 = scmp.lt.s32.totalorder %s98, 15
      %s100 = scalar_select %p99, %s98, 15
      %s101 = sadd.s32 %s28, 1
      %s102 = smul.u32 %s101, 4
      %p103 = scmp.lt.s32.totalorder %s102, 15
      %s104 = scalar_select %p103, %s102, 15
      %s105 = ssub.s32 %s20, %s32
      %s106 = ssub.s32 %s100, %s104
      %s107 = sor.u32 %s105, %s106
      %p108 = scmp.eq.s32.totalorder %s107, 0
      %s110 = sadd.s32 %s109, 1
      %s111 = scalar_select %p108, %s109, %s110
      %p114 = pneg %p108
      %p115 = scmp.eq.s32.totalorder %s13, 7
      %p116 = por %p114, %p115
      %p117 = scmp.ne.s32.totalorder %s109, %s112
      %p118 = scmp.eq.s32.totalorder %s13, 0
      %p119 = por %p117, %p118
      %p120 = scmp.ne.s32.totalorder %s109, %s112
      %p121 = scmp.eq.s32.totalorder %s18, 7
      %p122 = por %p120, %p121
      %p123 = scmp.ne.s32.totalorder %s112, %s113
      %p124 = scmp.eq.s32.totalorder %s18, 0
      %p125 = por %p123, %p124
      %p126 = scmp.ne.s32.totalorder %s112, %s113
      %p127 = scmp.eq.s32.totalorder %s19, 7
      %p128 = por %p126, %p127
      %p130 = scmp.ne.s32.totalorder %s113, %s129
      %p131 = scmp.eq.s32.totalorder %s19, 0
      %p132 = por %p130, %p131
      %s134 = sadd.s32 %s133, 1
      %p137 = scmp.eq.s32.totalorder %s13, 7
      %p138 = scmp.ne.s32.totalorder %s133, %s135
      %p139 = scmp.eq.s32.totalorder %s13, 0
      %p140 = por %p138, %p139
      %p141 = scmp.ne.s32.totalorder %s133, %s135
      %p142 = scmp.eq.s32.totalorder %s18, 7
      %p143 = por %p141, %p142
      %p144 = scmp.ne.s32.totalorder %s135, %s136
      %p145 = scmp.eq.s32.totalorder %s18, 0
      %p146 = por %p144, %p145
      %p147 = scmp.ne.s32.totalorder %s135, %s136
      %p148 = scmp.eq.s32.totalorder %s19, 7
      %p149 = por %p147, %p148
      %p151 = scmp.ne.s32.totalorder %s136, %s150
      %p152 = scmp.eq.s32.totalorder %s19, 0
      %p153 = por %p151, %p152
      %s154 = ssub.s32 %s20, %s32
      %s155 = ssub.s32 %s21, %s28
      %s156 = sor.u32 %s154, %s155
      %p157 = scmp.eq.s32.totalorder %s156, 0
      %s159 = sadd.s32 %s158, 1
      %s160 = scalar_select %p157, %s158, %s159
      %p163 = pneg %p157
      %p164 = scmp.eq.s32.totalorder %s13, 7
      %p165 = por %p163, %p164
      %p166 = scmp.ne.s32.totalorder %s158, %s161
      %p167 = scmp.eq.s32.totalorder %s13, 0
      %p168 = por %p166, %p167
      %p169 = scmp.ne.s32.totalorder %s158, %s161
      %p170 = scmp.eq.s32.totalorder %s18, 7
      %p171 = por %p169, %p170
      %p172 = scmp.ne.s32.totalorder %s161, %s162
      %p173 = scmp.eq.s32.totalorder %s18, 0
      %p174 = por %p172, %p173
      %p175 = scmp.ne.s32.totalorder %s161, %s162
      %p176 = scmp.eq.s32.totalorder %s19, 7
      %p177 = por %p175, %p176
      %p179 = scmp.ne.s32.totalorder %s162, %s178
      %p180 = scmp.eq.s32.totalorder %s19, 0
      %p181 = por %p179, %p180
      %p182 = scmp.le.s32.totalorder 1, %s13
      %p183 = scmp.lt.s32.totalorder %s13, 9
      %p184 = pnand %p182, %p183
      %p185 = pneg %p184
      // Predicated region
      $region9: #{tpu_custom_call.1} parent=5 // pred_check
        _
      $region10: #{tpu_custom_call.1} parent=5 // pred_check_branch
        %187 = sbr.rel (%p184) target = $region12
      $region11: #{tpu_custom_call.1} parent=5 // pred_region
        %s188 = ssub.s32 %s13, 1
        // Predicated region
        $region13: #{tpu_custom_call.1} parent=11 // pred_check
          %p189 = pneg %p146
        $region14: #{tpu_custom_call.1} parent=11 // pred_check_branch
          %191 = sbr.rel (%p189) target = $region16
        $region15: #{tpu_custom_call.1} parent=11 // pred_region
          _
        $region16: #{tpu_custom_call.1} parent=11 // pred_fallthru
          _
      $region12: #{tpu_custom_call.1} parent=5 // pred_fallthru
        _
      %p192 = scmp.lt.s32.totalorder %s13, 8
      // Predicated region
      $region17: #{tpu_custom_call.1} parent=5 // pred_check
        %p193 = pneg %p192
      $region18: #{tpu_custom_call.1} parent=5 // pred_check_branch
        %195 = sbr.rel (%p193) target = $region20
      $region19: #{tpu_custom_call.1} parent=5 // pred_region
        // Predicated region
        $region21: #{tpu_custom_call.1} parent=19 // pred_check
          %p196 = pneg %p47
        $region22: #{tpu_custom_call.1} parent=19 // pred_check_branch
          %198 = sbr.rel (%p196) target = $region24
        $region23: #{tpu_custom_call.1} parent=19 // pred_region
          %s199 = smul.u32 4, %s21
          %p200 = scmp.lt.s32.totalorder %s20, 1
          %s201 = scalar_select %p200, %s20, 1
          %p202 = scmp.lt.s32.totalorder %s199, 15
          %s203 = scalar_select %p202, %s199, 15
          %s204 = smul.addr %s203, 2
          %s205 = smul.addr %s201, 32
          %s206 = sadd.s32 %s204, %s205
          %s207 = smul.addr %s206, 8
          %s208 = scalar_lea.vmem %s0, %s207
          %s209 = smul.u32 4, %s21
        $region24: #{tpu_custom_call.1} parent=19 // pred_fallthru
          _
        // Predicated region
        $region25: #{tpu_custom_call.1} parent=19 // pred_check
          %p210 = pneg %p83
        $region26: #{tpu_custom_call.1} parent=19 // pred_check_branch
          %212 = sbr.rel (%p210) target = $region28
        $region27: #{tpu_custom_call.1} parent=19 // pred_region
          %s213 = smul.u32 %s21, 4
          %s214 = ssub.s32 %s213, 1
          %p215 = scmp.gt.s32.totalorder %s214, 0
          %s216 = scalar_select %p215, %s214, 0
          %p217 = scmp.lt.s32.totalorder %s20, 1
          %s218 = scalar_select %p217, %s20, 1
          %p219 = scmp.lt.s32.totalorder %s216, 15
          %s220 = scalar_select %p219, %s216, 15
          %s221 = smul.addr %s220, 2
          %s222 = smul.addr %s218, 32
          %s223 = sadd.s32 %s221, %s222
          %s224 = smul.addr %s223, 8
          %s225 = scalar_lea.vmem %s1, %s224
          %s226 = smul.u32 %s21, 4
          %s227 = ssub.s32 %s226, 1
          %p228 = scmp.gt.s32.totalorder %s227, 0
          %s229 = scalar_select %p228, %s227, 0
        $region28: #{tpu_custom_call.1} parent=19 // pred_fallthru
          _
        // Predicated region
        $region29: #{tpu_custom_call.1} parent=19 // pred_check
          %p230 = pneg %p119
        $region30: #{tpu_custom_call.1} parent=19 // pred_check_branch
          %232 = sbr.rel (%p230) target = $region32
        $region31: #{tpu_custom_call.1} parent=19 // pred_region
          %s233 = sadd.s32 %s21, 1
          %s234 = smul.u32 %s233, 4
          %p235 = scmp.lt.s32.totalorder %s234, 15
          %s236 = scalar_select %p235, %s234, 15
          %p237 = scmp.lt.s32.totalorder %s20, 1
          %s238 = scalar_select %p237, %s20, 1
          %p239 = scmp.lt.s32.totalorder %s236, 15
          %s240 = scalar_select %p239, %s236, 15
          %s241 = smul.addr %s240, 2
          %s242 = smul.addr %s238, 32
          %s243 = sadd.s32 %s241, %s242
          %s244 = smul.addr %s243, 8
          %s245 = scalar_lea.vmem %s2, %s244
          %s246 = sadd.s32 %s21, 1
          %s247 = smul.u32 %s246, 4
          %p248 = scmp.lt.s32.totalorder %s247, 15
          %s249 = scalar_select %p248, %s247, 15
        $region32: #{tpu_custom_call.1} parent=19 // pred_fallthru
          _
      $region20: #{tpu_custom_call.1} parent=5 // pred_fallthru
        _
      %p250 = scmp.le.s32.totalorder 1, %s13
      %p251 = scmp.lt.s32.totalorder %s13, 9
      %p252 = pnand %p250, %p251
      %p253 = pneg %p252
      // Predicated region
      $region33: #{tpu_custom_call.1} parent=5 // pred_check
        _
      $region34: #{tpu_custom_call.1} parent=5 // pred_check_branch
        %255 = sbr.rel (%p252) target = $region36
      $region35: #{tpu_custom_call.1} parent=5 // pred_region
        %s256 = ssub.s32 %s13, 1
        %s257 = smul.u32 4, %s23
        %p258 = scmp.lt.s32.totalorder %s22, 1
        %s259 = scalar_select %p258, %s22, 1
        %p260 = scmp.lt.s32.totalorder %s257, 15
        %s261 = scalar_select %p260, %s257, 15
        %s262 = smul.addr %s261, 2
        %s263 = smul.addr %s259, 32
        %s264 = sadd.s32 %s262, %s263
        %s265 = smul.addr %s264, 8
        %s266 = scalar_lea.vmem %s0, %s265
        %p267 = pneg %p53
        %p268 = pneg %p50
        %s269 = smul.u32 %s23, 4
        %s270 = ssub.s32 %s269, 1
        %p271 = scmp.gt.s32.totalorder %s270, 0
        %s272 = scalar_select %p271, %s270, 0
        %p273 = scmp.lt.s32.totalorder %s22, 1
        %s274 = scalar_select %p273, %s22, 1
        %p275 = scmp.lt.s32.totalorder %s272, 15
        %s276 = scalar_select %p275, %s272, 15
        %s277 = smul.addr %s276, 2
        %s278 = smul.addr %s274, 32
        %s279 = sadd.s32 %s277, %s278
        %s280 = smul.addr %s279, 8
        %s281 = scalar_lea.vmem %s1, %s280
        %p282 = pneg %p89
        %p283 = pneg %p86
        %s284 = sadd.s32 %s23, 1
        %s285 = smul.u32 %s284, 4
        %p286 = scmp.lt.s32.totalorder %s285, 15
        %s287 = scalar_select %p286, %s285, 15
        %p288 = scmp.lt.s32.totalorder %s22, 1
        %s289 = scalar_select %p288, %s22, 1
        %p290 = scmp.lt.s32.totalorder %s287, 15
        %s291 = scalar_select %p290, %s287, 15
        %s292 = smul.addr %s291, 2
        %s293 = smul.addr %s289, 32
        %s294 = sadd.s32 %s292, %s293
        %s295 = smul.addr %s294, 8
        %s296 = scalar_lea.vmem %s2, %s295
        %p297 = pneg %p125
        %p298 = pneg %p122
        %p299 = pneg %p146
        %p300 = pneg %p143
        %p301 = pneg %p174
        %p302 = pneg %p171
        %s303 = sand.u32 %s161, 1
        %s304 = scalar_lea.sflag [#allocation4], %s303
        %s305 = sand.u32 %s161, 1
        %s306 = smul.addr %s305, 64
        %s307 = scalar_lea.vmem [#allocation3], %s306
        %s308 = smul.u32 4, %s23
        %p309 = scmp.lt.s32.totalorder %s22, 1
        %s310 = scalar_select %p309, %s22, 1
        %p311 = scmp.lt.s32.totalorder %s308, 15
        %s312 = scalar_select %p311, %s308, 15
        %s313 = smul.addr %s312, 2
        %s314 = smul.addr %s310, 32
        %s315 = sadd.s32 %s313, %s314
        %s316 = smul.addr %s315, 8
        %s317 = scalar_lea.vmem %s0, %s316
        %s318 = smul.u32 4, %s23
        %s319 = smul.u32 %s23, 4
        %s320 = ssub.s32 %s319, 1
        %p321 = scmp.gt.s32.totalorder %s320, 0
        %s322 = scalar_select %p321, %s320, 0
        %p323 = scmp.lt.s32.totalorder %s22, 1
        %s324 = scalar_select %p323, %s22, 1
        %p325 = scmp.lt.s32.totalorder %s322, 15
        %s326 = scalar_select %p325, %s322, 15
        %s327 = smul.addr %s326, 2
        %s328 = smul.addr %s324, 32
        %s329 = sadd.s32 %s327, %s328
        %s330 = smul.addr %s329, 8
        %s331 = scalar_lea.vmem %s1, %s330
        %s332 = smul.u32 %s23, 4
        %s333 = ssub.s32 %s332, 1
        %p334 = scmp.gt.s32.totalorder %s333, 0
        %s335 = scalar_select %p334, %s333, 0
        %s336 = sadd.s32 %s23, 1
        %s337 = smul.u32 %s336, 4
        %p338 = scmp.lt.s32.totalorder %s337, 15
        %s339 = scalar_select %p338, %s337, 15
        %p340 = scmp.lt.s32.totalorder %s22, 1
        %s341 = scalar_select %p340, %s22, 1
        %p342 = scmp.lt.s32.totalorder %s339, 15
        %s343 = scalar_select %p342, %s339, 15
        %s344 = smul.addr %s343, 2
        %s345 = smul.addr %s341, 32
        %s346 = sadd.s32 %s344, %s345
        %s347 = smul.addr %s346, 8
        %s348 = scalar_lea.vmem %s2, %s347
        %s349 = sadd.s32 %s23, 1
        %s350 = smul.u32 %s349, 4
        %p351 = scmp.lt.s32.totalorder %s350, 15
        %s352 = scalar_select %p351, %s350, 15
        %s353 = smul.u32 4, %s23
        %p354 = scmp.gt.s32.totalorder %s23, 0
        %s355 = scalar_select %p354, 1, 0
        %s356 = scvt.s32.f32 %s355
        %p357 = scmp.lt.s32.totalorder %s23, 3
        %s358 = scalar_select %p357, 1, 0
        %s359 = scvt.s32.f32 %s358
        %v360 = vld [vmem:[%s331] sm:$0xff]
        %v361 = vld [vmem:[%s331 + $0x8] sm:$0xff]
        %v362 = vstv %s356
        %v363 = vmul.f32 %v360, %v362
        %v364 = vmul.f32 %v361, %v362
        %v365 = vld [vmem:[%s348] sm:$0xff]
        %v366 = vld [vmem:[%s348 + $0x8] sm:$0xff]
        %v367 = vstv %s359
        %v368 = vmul.f32 %v365, %v367
        %v369 = vmul.f32 %v366, %v367
        %vm370 = vcmask 31744
        %371 = vst.msk [vmem:[#allocation2 + $0x8] sm:$0xff] %vm370, %v363
        %372 = vst.msk [vmem:[#allocation2 + $0x10] sm:$0xff] %vm370, %v364
        %v373 = vld [vmem:[%s317] sm:$0xff]
        %v374 = vld [vmem:[%s317 + $0x8] sm:$0xff]
        %v375 = vld [vmem:[%s317 + $0x10] sm:$0xff]
        %v376 = vld [vmem:[%s317 + $0x18] sm:$0xff]
        %v377 = vld [vmem:[%s317 + $0x20] sm:$0xff]
        %v378 = vld [vmem:[%s317 + $0x28] sm:$0xff]
        %v379 = vld [vmem:[%s317 + $0x30] sm:$0xff]
        %v380 = vld [vmem:[%s317 + $0x38] sm:$0xff]
        %381 = vst.msk [vmem:[#allocation2 + $0x18] sm:$0xff] %vm370, %v373
        %382 = vst.msk [vmem:[#allocation2 + $0x20] sm:$0xff] %vm370, %v374
        %383 = vst.msk [vmem:[#allocation2 + $0x28] sm:$0xff] %vm370, %v375
        %384 = vst.msk [vmem:[#allocation2 + $0x30] sm:$0xff] %vm370, %v376
        %385 = vst.msk [vmem:[#allocation2 + $0x38] sm:$0xff] %vm370, %v377
        %386 = vst.msk [vmem:[#allocation2 + $0x40] sm:$0xff] %vm370, %v378
        %387 = vst.msk [vmem:[#allocation2 + $0x48] sm:$0xff] %vm370, %v379
        %388 = vst.msk [vmem:[#allocation2 + $0x50] sm:$0xff] %vm370, %v380
        %389 = vst.msk [vmem:[#allocation2 + $0x58] sm:$0xff] %vm370, %v368
        %390 = vst.msk [vmem:[#allocation2 + $0x60] sm:$0xff] %vm370, %v369
        %v391 = vld [vmem:[#allocation2 + $0x7] sm:$0xff]
        %v392 = vld [vmem:[#allocation2 + $0xf] sm:$0xff]
        %v393 = vld [vmem:[#allocation2 + $0x17] sm:$0xff]
        %v394 = vld [vmem:[#allocation2 + $0x1f] sm:$0xff]
        %v395 = vld [vmem:[#allocation2 + $0x27] sm:$0xff]
        %v396 = vld [vmem:[#allocation2 + $0x2f] sm:$0xff]
        %v397 = vld [vmem:[#allocation2 + $0x37] sm:$0xff]
        %v398 = vld [vmem:[#allocation2 + $0x3f] sm:$0xff]
        %v399 = vld [vmem:[%s3] sm:$0xf]
        %v400 = vld [vmem:[#allocation2 + $0x8] sm:$0xff]
        %v401 = vld [vmem:[#allocation2 + $0x10] sm:$0xff]
        %v402 = vld [vmem:[#allocation2 + $0x18] sm:$0xff]
        %v403 = vld [vmem:[#allocation2 + $0x20] sm:$0xff]
        %v404 = vld [vmem:[#allocation2 + $0x28] sm:$0xff]
        %v405 = vld [vmem:[#allocation2 + $0x30] sm:$0xff]
        %v406 = vld [vmem:[#allocation2 + $0x38] sm:$0xff]
        %v407 = vld [vmem:[#allocation2 + $0x40] sm:$0xff]
        %s408 = scalar_lea.vmem %s3, 4
        %v409 = vld [vmem:[%s408] sm:$0xf]
        %v411 = vsel %vm370, %v400, 0
        %v414 = vsel %vm370, %v401, 0
        %v417 = vsel %vm370, %v402, 0
        %v420 = vsel %vm370, %v403, 0
        %v423 = vsel %vm370, %v404, 0
        %v426 = vsel %vm370, %v405, 0
        %v429 = vsel %vm370, %v406, 0
        %v432 = vsel %vm370, %v407, 0
        %vm434 = vcmask 1043456
        %v436 = vsel %vm434, %v409, 0
        %438 = vmatprep.subr.mxu0 0.0
        %439 = vmatpush1.msra.mxu0 0.0
        %440 = vmatprep.subr.mxu0 0.0
        %441 = vmatpush1.msra.mxu0 0.0
        %442 = vmatprep.subr.mxu0 0.0
        %443 = vmatpush1.msra.mxu0 0.0
        %444 = vmatprep.subr.mxu0 0.0
        %445 = vmatpush1.msra.mxu0 0.0
        %446 = vmatprep.subr.mxu0 0.0
        %447 = vmatpush1.msra.mxu0 0.0
        %448 = vmatprep.subr.mxu0 0.0
        %449 = vmatpush1.msra.mxu0 0.0
        %450 = vmatprep.subr.mxu0 0.0
        %451 = vmatpush1.msra.mxu0 0.0
        %452 = vmatprep.subr.mxu0 0.0
        %453 = vmatpush1.msra.mxu0 0.0
        %454 = vmatprep.subr.mxu0 0.0
        %455 = vmatpush1.msra.mxu0 0.0
        %456 = vmatprep.subr.mxu0 0.0
        %457 = vmatpush1.msra.mxu0 0.0
        %458 = vmatprep.subr.mxu0 0.0
        %459 = vmatpush1.msra.mxu0 0.0
        %460 = vmatprep.subr.mxu0 0.0
        %461 = vmatpush1.msra.mxu0 0.0
        %462 = vmatprep.subr.mxu0 0.0
        %463 = vmatpush1.msra.mxu0 0.0
        %464 = vmatprep.subr.mxu0 0.0
        %465 = vmatpush1.msra.mxu0 0.0
        %466 = vmatprep.subr.mxu0 0.0
        %467 = vmatpush1.msra.mxu0 0.0
        %468 = vmatprep.subr.mxu0 0.0
        %469 = vmatpush1.msra.mxu0 %v436
        %470 = vmatprep.subr.mxu0 0.0
        %471 = vmatpush2.msra.mxu0 0.0
        %472 = vmatprep.subr.mxu0 0.0
        %473 = vmatpush2.msra.mxu0 0.0
        %474 = vmatprep.subr.mxu0 0.0
        %475 = vmatpush2.msra.mxu0 0.0
        %476 = vmatprep.subr.mxu0 0.0
        %477 = vmatpush2.msra.mxu0 0.0
        %478 = vmatprep.subr.mxu0 0.0
        %479 = vmatpush2.msra.mxu0 0.0
        %480 = vmatprep.subr.mxu0 0.0
        %481 = vmatpush2.msra.mxu0 0.0
        %482 = vmatprep.subr.mxu0 0.0
        %483 = vmatpush2.msra.mxu0 0.0
        %484 = vmatprep.subr.mxu0 0.0
        %485 = vmatpush2.msra.mxu0 0.0
        %486 = vmatprep.subr.mxu0 0.0
        %487 = vmatpush2.msra.mxu0 0.0
        %488 = vmatprep.subr.mxu0 0.0
        %489 = vmatpush2.msra.mxu0 0.0
        %490 = vmatprep.subr.mxu0 0.0
        %491 = vmatpush2.msra.mxu0 0.0
        %492 = vmatprep.subr.mxu0 0.0
        %493 = vmatpush2.msra.mxu0 0.0
        %494 = vmatprep.subr.mxu0 0.0
        %495 = vmatpush2.msra.mxu0 0.0
        %496 = vmatprep.subr.mxu0 0.0
        %497 = vmatpush2.msra.mxu0 0.0
        %498 = vmatprep.subr.mxu0 0.0
        %499 = vmatpush2.msra.mxu0 0.0
        %500 = vmatprep.subr.mxu0 0.0
        %501 = vmatpush2.msra.mxu0 0.0
        %502 = vmatprep.mubr.f32.mxu0 0.0
        %503 = vmatmul.mubr.f32.gmra.mxu0 %v411
        %v504 = vpop.f32.mrf.mxu0
        %v505 = vadd.f32 0.0, %v504
        %v506 = vpop.f32.mrf.mxu0
        %507 = vmatprep.mubr.f32.mxu0 0.0
        %508 = vmatmul.mubr.f32.gmra.mxu0 %v414
        %v509 = vpop.f32.mrf.mxu0
        %v510 = vadd.f32 0.0, %v509
        %v511 = vpop.f32.mrf.mxu0
        %512 = vmatprep.mubr.f32.mxu0 0.0
        %513 = vmatmul.mubr.f32.gmra.mxu0 %v417
        %v514 = vpop.f32.mrf.mxu0
        %v515 = vadd.f32 0.0, %v514
        %v516 = vpop.f32.mrf.mxu0
        %517 = vmatprep.mubr.f32.mxu0 0.0
        %518 = vmatmul.mubr.f32.gmra.mxu0 %v420
        %v519 = vpop.f32.mrf.mxu0
        %v520 = vadd.f32 0.0, %v519
        %v521 = vpop.f32.mrf.mxu0
        %522 = vmatprep.mubr.f32.mxu0 0.0
        %523 = vmatmul.mubr.f32.gmra.mxu0 %v423
        %v524 = vpop.f32.mrf.mxu0
        %v525 = vadd.f32 0.0, %v524
        %v526 = vpop.f32.mrf.mxu0
        %527 = vmatprep.mubr.f32.mxu0 0.0
        %528 = vmatmul.mubr.f32.gmra.mxu0 %v426
        %v529 = vpop.f32.mrf.mxu0
        %v530 = vadd.f32 0.0, %v529
        %v531 = vpop.f32.mrf.mxu0
        %532 = vmatprep.mubr.f32.mxu0 0.0
        %533 = vmatmul.mubr.f32.gmra.mxu0 %v429
        %v534 = vpop.f32.mrf.mxu0
        %v535 = vadd.f32 0.0, %v534
        %v536 = vpop.f32.mrf.mxu0
        %537 = vmatprep.mubr.f32.mxu0 0.0
        %538 = vmatmul.mubr.f32.gmra.mxu0 %v432
        %v539 = vpop.f32.mrf.mxu0
        %v540 = vadd.f32 0.0, %v539
        %v541 = vpop.f32.mrf.mxu0
        %542 = vdwg.mxu0
        %v544 = vsel %vm370, %v391, 0
        %v547 = vsel %vm370, %v392, 0
        %v550 = vsel %vm370, %v393, 0
        %v553 = vsel %vm370, %v394, 0
        %v556 = vsel %vm370, %v395, 0
        %v559 = vsel %vm370, %v396, 0
        %v562 = vsel %vm370, %v397, 0
        %v565 = vsel %vm370, %v398, 0
        %v568 = vsel %vm434, %v399, 0
        %570 = vmatprep.subr.mxu0 0.0
        %571 = vmatpush1.msra.mxu0 0.0
        %572 = vmatprep.subr.mxu0 0.0
        %573 = vmatpush1.msra.mxu0 0.0
        %574 = vmatprep.subr.mxu0 0.0
        %575 = vmatpush1.msra.mxu0 0.0
        %576 = vmatprep.subr.mxu0 0.0
        %577 = vmatpush1.msra.mxu0 0.0
        %578 = vmatprep.subr.mxu0 0.0
        %579 = vmatpush1.msra.mxu0 0.0
        %580 = vmatprep.subr.mxu0 0.0
        %581 = vmatpush1.msra.mxu0 0.0
        %582 = vmatprep.subr.mxu0 0.0
        %583 = vmatpush1.msra.mxu0 0.0
        %584 = vmatprep.subr.mxu0 0.0
        %585 = vmatpush1.msra.mxu0 0.0
        %586 = vmatprep.subr.mxu0 0.0
        %587 = vmatpush1.msra.mxu0 0.0
        %588 = vmatprep.subr.mxu0 0.0
        %589 = vmatpush1.msra.mxu0 0.0
        %590 = vmatprep.subr.mxu0 0.0
        %591 = vmatpush1.msra.mxu0 0.0
        %592 = vmatprep.subr.mxu0 0.0
        %593 = vmatpush1.msra.mxu0 0.0
        %594 = vmatprep.subr.mxu0 0.0
        %595 = vmatpush1.msra.mxu0 0.0
        %596 = vmatprep.subr.mxu0 0.0
        %597 = vmatpush1.msra.mxu0 0.0
        %598 = vmatprep.subr.mxu0 0.0
        %599 = vmatpush1.msra.mxu0 0.0
        %600 = vmatprep.subr.mxu0 0.0
        %601 = vmatpush1.msra.mxu0 %v568
        %602 = vmatprep.subr.mxu0 0.0
        %603 = vmatpush2.msra.mxu0 0.0
        %604 = vmatprep.subr.mxu0 0.0
        %605 = vmatpush2.msra.mxu0 0.0
        %606 = vmatprep.subr.mxu0 0.0
        %607 = vmatpush2.msra.mxu0 0.0
        %608 = vmatprep.subr.mxu0 0.0
        %609 = vmatpush2.msra.mxu0 0.0
        %610 = vmatprep.subr.mxu0 0.0
        %611 = vmatpush2.msra.mxu0 0.0
        %612 = vmatprep.subr.mxu0 0.0
        %613 = vmatpush2.msra.mxu0 0.0
        %614 = vmatprep.subr.mxu0 0.0
        %615 = vmatpush2.msra.mxu0 0.0
        %616 = vmatprep.subr.mxu0 0.0
        %617 = vmatpush2.msra.mxu0 0.0
        %618 = vmatprep.subr.mxu0 0.0
        %619 = vmatpush2.msra.mxu0 0.0
        %620 = vmatprep.subr.mxu0 0.0
        %621 = vmatpush2.msra.mxu0 0.0
        %622 = vmatprep.subr.mxu0 0.0
        %623 = vmatpush2.msra.mxu0 0.0
        %624 = vmatprep.subr.mxu0 0.0
        %625 = vmatpush2.msra.mxu0 0.0
        %626 = vmatprep.subr.mxu0 0.0
        %627 = vmatpush2.msra.mxu0 0.0
        %628 = vmatprep.subr.mxu0 0.0
        %629 = vmatpush2.msra.mxu0 0.0
        %630 = vmatprep.subr.mxu0 0.0
        %631 = vmatpush2.msra.mxu0 0.0
        %632 = vmatprep.subr.mxu0 0.0
        %633 = vmatpush2.msra.mxu0 0.0
        %634 = vmatprep.mubr.f32.mxu0 0.0
        %635 = vmatmul.mubr.f32.gmra.mxu0 %v544
        %v636 = vpop.f32.mrf.mxu0
        %v637 = vadd.f32 %v505, %v636
        %v638 = vpop.f32.mrf.mxu0
        %639 = vmatprep.mubr.f32.mxu0 0.0
        %640 = vmatmul.mubr.f32.gmra.mxu0 %v547
        %v641 = vpop.f32.mrf.mxu0
        %v642 = vadd.f32 %v510, %v641
        %v643 = vpop.f32.mrf.mxu0
        %644 = vmatprep.mubr.f32.mxu0 0.0
        %645 = vmatmul.mubr.f32.gmra.mxu0 %v550
        %v646 = vpop.f32.mrf.mxu0
        %v647 = vadd.f32 %v515, %v646
        %v648 = vpop.f32.mrf.mxu0
        %649 = vmatprep.mubr.f32.mxu0 0.0
        %650 = vmatmul.mubr.f32.gmra.mxu0 %v553
        %v651 = vpop.f32.mrf.mxu0
        %v652 = vadd.f32 %v520, %v651
        %v653 = vpop.f32.mrf.mxu0
        %654 = vmatprep.mubr.f32.mxu0 0.0
        %655 = vmatmul.mubr.f32.gmra.mxu0 %v556
        %v656 = vpop.f32.mrf.mxu0
        %v657 = vadd.f32 %v525, %v656
        %v658 = vpop.f32.mrf.mxu0
        %659 = vmatprep.mubr.f32.mxu0 0.0
        %660 = vmatmul.mubr.f32.gmra.mxu0 %v559
        %v661 = vpop.f32.mrf.mxu0
        %v662 = vadd.f32 %v530, %v661
        %v663 = vpop.f32.mrf.mxu0
        %664 = vmatprep.mubr.f32.mxu0 0.0
        %665 = vmatmul.mubr.f32.gmra.mxu0 %v562
        %v666 = vpop.f32.mrf.mxu0
        %v667 = vadd.f32 %v535, %v666
        %v668 = vpop.f32.mrf.mxu0
        %669 = vmatprep.mubr.f32.mxu0 0.0
        %670 = vmatmul.mubr.f32.gmra.mxu0 %v565
        %v671 = vpop.f32.mrf.mxu0
        %v672 = vadd.f32 %v540, %v671
        %v673 = vpop.f32.mrf.mxu0
        %674 = vdwg.mxu0
        %v675 = vld [vmem:[#allocation2 + $0x9] sm:$0xff]
        %v676 = vld [vmem:[#allocation2 + $0x11] sm:$0xff]
        %v677 = vld [vmem:[#allocation2 + $0x19] sm:$0xff]
        %v678 = vld [vmem:[#allocation2 + $0x21] sm:$0xff]
        %v679 = vld [vmem:[#allocation2 + $0x29] sm:$0xff]
        %v680 = vld [vmem:[#allocation2 + $0x31] sm:$0xff]
        %v681 = vld [vmem:[#allocation2 + $0x39] sm:$0xff]
        %v682 = vld [vmem:[#allocation2 + $0x41] sm:$0xff]
        %s683 = scalar_lea.vmem %s3, 8
        %v684 = vld [vmem:[%s683] sm:$0xf]
        %v686 = vsel %vm370, %v675, 0
        %v689 = vsel %vm370, %v676, 0
        %v692 = vsel %vm370, %v677, 0
        %v695 = vsel %vm370, %v678, 0
        %v698 = vsel %vm370, %v679, 0
        %v701 = vsel %vm370, %v680, 0
        %v704 = vsel %vm370, %v681, 0
        %v707 = vsel %vm370, %v682, 0
        %v710 = vsel %vm434, %v684, 0
        %712 = vmatprep.subr.mxu0 0.0
        %713 = vmatpush1.msra.mxu0 0.0
        %714 = vmatprep.subr.mxu0 0.0
        %715 = vmatpush1.msra.mxu0 0.0
        %716 = vmatprep.subr.mxu0 0.0
        %717 = vmatpush1.msra.mxu0 0.0
        %718 = vmatprep.subr.mxu0 0.0
        %719 = vmatpush1.msra.mxu0 0.0
        %720 = vmatprep.subr.mxu0 0.0
        %721 = vmatpush1.msra.mxu0 0.0
        %722 = vmatprep.subr.mxu0 0.0
        %723 = vmatpush1.msra.mxu0 0.0
        %724 = vmatprep.subr.mxu0 0.0
        %725 = vmatpush1.msra.mxu0 0.0
        %726 = vmatprep.subr.mxu0 0.0
        %727 = vmatpush1.msra.mxu0 0.0
        %728 = vmatprep.subr.mxu0 0.0
        %729 = vmatpush1.msra.mxu0 0.0
        %730 = vmatprep.subr.mxu0 0.0
        %731 = vmatpush1.msra.mxu0 0.0
        %732 = vmatprep.subr.mxu0 0.0
        %733 = vmatpush1.msra.mxu0 0.0
        %734 = vmatprep.subr.mxu0 0.0
        %735 = vmatpush1.msra.mxu0 0.0
        %736 = vmatprep.subr.mxu0 0.0
        %737 = vmatpush1.msra.mxu0 0.0
        %738 = vmatprep.subr.mxu0 0.0
        %739 = vmatpush1.msra.mxu0 0.0
        %740 = vmatprep.subr.mxu0 0.0
        %741 = vmatpush1.msra.mxu0 0.0
        %742 = vmatprep.subr.mxu0 0.0
        %743 = vmatpush1.msra.mxu0 %v710
        %744 = vmatprep.subr.mxu0 0.0
        %745 = vmatpush2.msra.mxu0 0.0
        %746 = vmatprep.subr.mxu0 0.0
        %747 = vmatpush2.msra.mxu0 0.0
        %748 = vmatprep.subr.mxu0 0.0
        %749 = vmatpush2.msra.mxu0 0.0
        %750 = vmatprep.subr.mxu0 0.0
        %751 = vmatpush2.msra.mxu0 0.0
        %752 = vmatprep.subr.mxu0 0.0
        %753 = vmatpush2.msra.mxu0 0.0
        %754 = vmatprep.subr.mxu0 0.0
        %755 = vmatpush2.msra.mxu0 0.0
        %756 = vmatprep.subr.mxu0 0.0
        %757 = vmatpush2.msra.mxu0 0.0
        %758 = vmatprep.subr.mxu0 0.0
        %759 = vmatpush2.msra.mxu0 0.0
        %760 = vmatprep.subr.mxu0 0.0
        %761 = vmatpush2.msra.mxu0 0.0
        %762 = vmatprep.subr.mxu0 0.0
        %763 = vmatpush2.msra.mxu0 0.0
        %764 = vmatprep.subr.mxu0 0.0
        %765 = vmatpush2.msra.mxu0 0.0
        %766 = vmatprep.subr.mxu0 0.0
        %767 = vmatpush2.msra.mxu0 0.0
        %768 = vmatprep.subr.mxu0 0.0
        %769 = vmatpush2.msra.mxu0 0.0
        %770 = vmatprep.subr.mxu0 0.0
        %771 = vmatpush2.msra.mxu0 0.0
        %772 = vmatprep.subr.mxu0 0.0
        %773 = vmatpush2.msra.mxu0 0.0
        %774 = vmatprep.subr.mxu0 0.0
        %775 = vmatpush2.msra.mxu0 0.0
        %776 = vmatprep.mubr.f32.mxu0 0.0
        %777 = vmatmul.mubr.f32.gmra.mxu0 %v686
        %v778 = vpop.f32.mrf.mxu0
        %v779 = vadd.f32 0.0, %v778
        %v780 = vpop.f32.mrf.mxu0
        %781 = vmatprep.mubr.f32.mxu0 0.0
        %782 = vmatmul.mubr.f32.gmra.mxu0 %v689
        %v783 = vpop.f32.mrf.mxu0
        %v784 = vadd.f32 0.0, %v783
        %v785 = vpop.f32.mrf.mxu0
        %786 = vmatprep.mubr.f32.mxu0 0.0
        %787 = vmatmul.mubr.f32.gmra.mxu0 %v692
        %v788 = vpop.f32.mrf.mxu0
        %v789 = vadd.f32 0.0, %v788
        %v790 = vpop.f32.mrf.mxu0
        %791 = vmatprep.mubr.f32.mxu0 0.0
        %792 = vmatmul.mubr.f32.gmra.mxu0 %v695
        %v793 = vpop.f32.mrf.mxu0
        %v794 = vadd.f32 0.0, %v793
        %v795 = vpop.f32.mrf.mxu0
        %796 = vmatprep.mubr.f32.mxu0 0.0
        %797 = vmatmul.mubr.f32.gmra.mxu0 %v698
        %v798 = vpop.f32.mrf.mxu0
        %v799 = vadd.f32 0.0, %v798
        %v800 = vpop.f32.mrf.mxu0
        %801 = vmatprep.mubr.f32.mxu0 0.0
        %802 = vmatmul.mubr.f32.gmra.mxu0 %v701
        %v803 = vpop.f32.mrf.mxu0
        %v804 = vadd.f32 0.0, %v803
        %v805 = vpop.f32.mrf.mxu0
        %806 = vmatprep.mubr.f32.mxu0 0.0
        %807 = vmatmul.mubr.f32.gmra.mxu0 %v704
        %v808 = vpop.f32.mrf.mxu0
        %v809 = vadd.f32 0.0, %v808
        %v810 = vpop.f32.mrf.mxu0
        %811 = vmatprep.mubr.f32.mxu0 0.0
        %812 = vmatmul.mubr.f32.gmra.mxu0 %v707
        %v813 = vpop.f32.mrf.mxu0
        %v814 = vadd.f32 0.0, %v813
        %v815 = vpop.f32.mrf.mxu0
        %816 = vdwg.mxu0
        %v817 = vadd.f32 %v637, %v779
        %v818 = vadd.f32 %v642, %v784
        %v819 = vadd.f32 %v647, %v789
        %v820 = vadd.f32 %v652, %v794
        %v821 = vadd.f32 %v657, %v799
        %v822 = vadd.f32 %v662, %v804
        %v823 = vadd.f32 %v667, %v809
        %v824 = vadd.f32 %v672, %v814
        %v825 = vld [vmem:[#allocation2 + $0x17] sm:$0xff]
        %v826 = vld [vmem:[#allocation2 + $0x1f] sm:$0xff]
        %v827 = vld [vmem:[#allocation2 + $0x27] sm:$0xff]
        %v828 = vld [vmem:[#allocation2 + $0x2f] sm:$0xff]
        %v829 = vld [vmem:[#allocation2 + $0x37] sm:$0xff]
        %v830 = vld [vmem:[#allocation2 + $0x3f] sm:$0xff]
        %v831 = vld [vmem:[#allocation2 + $0x47] sm:$0xff]
        %v832 = vld [vmem:[#allocation2 + $0x4f] sm:$0xff]
        %s833 = scalar_lea.vmem %s3, 12
        %v834 = vld [vmem:[%s833] sm:$0xf]
        %v836 = vsel %vm370, %v825, 0
        %v839 = vsel %vm370, %v826, 0
        %v842 = vsel %vm370, %v827, 0
        %v845 = vsel %vm370, %v828, 0
        %v848 = vsel %vm370, %v829, 0
        %v851 = vsel %vm370, %v830, 0
        %v854 = vsel %vm370, %v831, 0
        %v857 = vsel %vm370, %v832, 0
        %v860 = vsel %vm434, %v834, 0
        %862 = vmatprep.subr.mxu0 0.0
        %863 = vmatpush1.msra.mxu0 0.0
        %864 = vmatprep.subr.mxu0 0.0
        %865 = vmatpush1.msra.mxu0 0.0
        %866 = vmatprep.subr.mxu0 0.0
        %867 = vmatpush1.msra.mxu0 0.0
        %868 = vmatprep.subr.mxu0 0.0
        %869 = vmatpush1.msra.mxu0 0.0
        %870 = vmatprep.subr.mxu0 0.0
        %871 = vmatpush1.msra.mxu0 0.0
        %872 = vmatprep.subr.mxu0 0.0
        %873 = vmatpush1.msra.mxu0 0.0
        %874 = vmatprep.subr.mxu0 0.0
        %875 = vmatpush1.msra.mxu0 0.0
        %876 = vmatprep.subr.mxu0 0.0
        %877 = vmatpush1.msra.mxu0 0.0
        %878 = vmatprep.subr.mxu0 0.0
        %879 = vmatpush1.msra.mxu0 0.0
        %880 = vmatprep.subr.mxu0 0.0
        %881 = vmatpush1.msra.mxu0 0.0
        %882 = vmatprep.subr.mxu0 0.0
        %883 = vmatpush1.msra.mxu0 0.0
        %884 = vmatprep.subr.mxu0 0.0
        %885 = vmatpush1.msra.mxu0 0.0
        %886 = vmatprep.subr.mxu0 0.0
        %887 = vmatpush1.msra.mxu0 0.0
        %888 = vmatprep.subr.mxu0 0.0
        %889 = vmatpush1.msra.mxu0 0.0
        %890 = vmatprep.subr.mxu0 0.0
        %891 = vmatpush1.msra.mxu0 0.0
        %892 = vmatprep.subr.mxu0 0.0
        %893 = vmatpush1.msra.mxu0 %v860
        %894 = vmatprep.subr.mxu0 0.0
        %895 = vmatpush2.msra.mxu0 0.0
        %896 = vmatprep.subr.mxu0 0.0
        %897 = vmatpush2.msra.mxu0 0.0
        %898 = vmatprep.subr.mxu0 0.0
        %899 = vmatpush2.msra.mxu0 0.0
        %900 = vmatprep.subr.mxu0 0.0
        %901 = vmatpush2.msra.mxu0 0.0
        %902 = vmatprep.subr.mxu0 0.0
        %903 = vmatpush2.msra.mxu0 0.0
        %904 = vmatprep.subr.mxu0 0.0
        %905 = vmatpush2.msra.mxu0 0.0
        %906 = vmatprep.subr.mxu0 0.0
        %907 = vmatpush2.msra.mxu0 0.0
        %908 = vmatprep.subr.mxu0 0.0
        %909 = vmatpush2.msra.mxu0 0.0
        %910 = vmatprep.subr.mxu0 0.0
        %911 = vmatpush2.msra.mxu0 0.0
        %912 = vmatprep.subr.mxu0 0.0
        %913 = vmatpush2.msra.mxu0 0.0
        %914 = vmatprep.subr.mxu0 0.0
        %915 = vmatpush2.msra.mxu0 0.0
        %916 = vmatprep.subr.mxu0 0.0
        %917 = vmatpush2.msra.mxu0 0.0
        %918 = vmatprep.subr.mxu0 0.0
        %919 = vmatpush2.msra.mxu0 0.0
        %920 = vmatprep.subr.mxu0 0.0
        %921 = vmatpush2.msra.mxu0 0.0
        %922 = vmatprep.subr.mxu0 0.0
        %923 = vmatpush2.msra.mxu0 0.0
        %924 = vmatprep.subr.mxu0 0.0
        %925 = vmatpush2.msra.mxu0 0.0
        %926 = vmatprep.mubr.f32.mxu0 0.0
        %927 = vmatmul.mubr.f32.gmra.mxu0 %v836
        %v928 = vpop.f32.mrf.mxu0
        %v929 = vadd.f32 0.0, %v928
        %v930 = vpop.f32.mrf.mxu0
        %931 = vmatprep.mubr.f32.mxu0 0.0
        %932 = vmatmul.mubr.f32.gmra.mxu0 %v839
        %v933 = vpop.f32.mrf.mxu0
        %v934 = vadd.f32 0.0, %v933
        %v935 = vpop.f32.mrf.mxu0
        %936 = vmatprep.mubr.f32.mxu0 0.0
        %937 = vmatmul.mubr.f32.gmra.mxu0 %v842
        %v938 = vpop.f32.mrf.mxu0
        %v939 = vadd.f32 0.0, %v938
        %v940 = vpop.f32.mrf.mxu0
        %941 = vmatprep.mubr.f32.mxu0 0.0
        %942 = vmatmul.mubr.f32.gmra.mxu0 %v845
        %v943 = vpop.f32.mrf.mxu0
        %v944 = vadd.f32 0.0, %v943
        %v945 = vpop.f32.mrf.mxu0
        %946 = vmatprep.mubr.f32.mxu0 0.0
        %947 = vmatmul.mubr.f32.gmra.mxu0 %v848
        %v948 = vpop.f32.mrf.mxu0
        %v949 = vadd.f32 0.0, %v948
        %v950 = vpop.f32.mrf.mxu0
        %951 = vmatprep.mubr.f32.mxu0 0.0
        %952 = vmatmul.mubr.f32.gmra.mxu0 %v851
        %v953 = vpop.f32.mrf.mxu0
        %v954 = vadd.f32 0.0, %v953
        %v955 = vpop.f32.mrf.mxu0
        %956 = vmatprep.mubr.f32.mxu0 0.0
        %957 = vmatmul.mubr.f32.gmra.mxu0 %v854
        %v958 = vpop.f32.mrf.mxu0
        %v959 = vadd.f32 0.0, %v958
        %v960 = vpop.f32.mrf.mxu0
        %961 = vmatprep.mubr.f32.mxu0 0.0
        %962 = vmatmul.mubr.f32.gmra.mxu0 %v857
        %v963 = vpop.f32.mrf.mxu0
        %v964 = vadd.f32 0.0, %v963
        %v965 = vpop.f32.mrf.mxu0
        %966 = vdwg.mxu0
        %v967 = vadd.f32 %v817, %v929
        %v968 = vadd.f32 %v818, %v934
        %v969 = vadd.f32 %v819, %v939
        %v970 = vadd.f32 %v820, %v944
        %v971 = vadd.f32 %v821, %v949
        %v972 = vadd.f32 %v822, %v954
        %v973 = vadd.f32 %v823, %v959
        %v974 = vadd.f32 %v824, %v964
        %v975 = vld [vmem:[#allocation2 + $0x18] sm:$0xff]
        %v976 = vld [vmem:[#allocation2 + $0x20] sm:$0xff]
        %v977 = vld [vmem:[#allocation2 + $0x28] sm:$0xff]
        %v978 = vld [vmem:[#allocation2 + $0x30] sm:$0xff]
        %v979 = vld [vmem:[#allocation2 + $0x38] sm:$0xff]
        %v980 = vld [vmem:[#allocation2 + $0x40] sm:$0xff]
        %v981 = vld [vmem:[#allocation2 + $0x48] sm:$0xff]
        %v982 = vld [vmem:[#allocation2 + $0x50] sm:$0xff]
        %s983 = scalar_lea.vmem %s3, 16
        %v984 = vld [vmem:[%s983] sm:$0xf]
        %v986 = vsel %vm370, %v975, 0
        %v989 = vsel %vm370, %v976, 0
        %v992 = vsel %vm370, %v977, 0
        %v995 = vsel %vm370, %v978, 0
        %v998 = vsel %vm370, %v979, 0
        %v1001 = vsel %vm370, %v980, 0
        %v1004 = vsel %vm370, %v981, 0
        %v1007 = vsel %vm370, %v982, 0
        %v1010 = vsel %vm434, %v984, 0
        %1012 = vmatprep.subr.mxu0 0.0
        %1013 = vmatpush1.msra.mxu0 0.0
        %1014 = vmatprep.subr.mxu0 0.0
        %1015 = vmatpush1.msra.mxu0 0.0
        %1016 = vmatprep.subr.mxu0 0.0
        %1017 = vmatpush1.msra.mxu0 0.0
        %1018 = vmatprep.subr.mxu0 0.0
        %1019 = vmatpush1.msra.mxu0 0.0
        %1020 = vmatprep.subr.mxu0 0.0
        %1021 = vmatpush1.msra.mxu0 0.0
        %1022 = vmatprep.subr.mxu0 0.0
        %1023 = vmatpush1.msra.mxu0 0.0
        %1024 = vmatprep.subr.mxu0 0.0
        %1025 = vmatpush1.msra.mxu0 0.0
        %1026 = vmatprep.subr.mxu0 0.0
        %1027 = vmatpush1.msra.mxu0 0.0
        %1028 = vmatprep.subr.mxu0 0.0
        %1029 = vmatpush1.msra.mxu0 0.0
        %1030 = vmatprep.subr.mxu0 0.0
        %1031 = vmatpush1.msra.mxu0 0.0
        %1032 = vmatprep.subr.mxu0 0.0
        %1033 = vmatpush1.msra.mxu0 0.0
        %1034 = vmatprep.subr.mxu0 0.0
        %1035 = vmatpush1.msra.mxu0 0.0
        %1036 = vmatprep.subr.mxu0 0.0
        %1037 = vmatpush1.msra.mxu0 0.0
        %1038 = vmatprep.subr.mxu0 0.0
        %1039 = vmatpush1.msra.mxu0 0.0
        %1040 = vmatprep.subr.mxu0 0.0
        %1041 = vmatpush1.msra.mxu0 0.0
        %1042 = vmatprep.subr.mxu0 0.0
        %1043 = vmatpush1.msra.mxu0 %v1010
        %1044 = vmatprep.subr.mxu0 0.0
        %1045 = vmatpush2.msra.mxu0 0.0
        %1046 = vmatprep.subr.mxu0 0.0
        %1047 = vmatpush2.msra.mxu0 0.0
        %1048 = vmatprep.subr.mxu0 0.0
        %1049 = vmatpush2.msra.mxu0 0.0
        %1050 = vmatprep.subr.mxu0 0.0
        %1051 = vmatpush2.msra.mxu0 0.0
        %1052 = vmatprep.subr.mxu0 0.0
        %1053 = vmatpush2.msra.mxu0 0.0
        %1054 = vmatprep.subr.mxu0 0.0
        %1055 = vmatpush2.msra.mxu0 0.0
        %1056 = vmatprep.subr.mxu0 0.0
        %1057 = vmatpush2.msra.mxu0 0.0
        %1058 = vmatprep.subr.mxu0 0.0
        %1059 = vmatpush2.msra.mxu0 0.0
        %1060 = vmatprep.subr.mxu0 0.0
        %1061 = vmatpush2.msra.mxu0 0.0
        %1062 = vmatprep.subr.mxu0 0.0
        %1063 = vmatpush2.msra.mxu0 0.0
        %1064 = vmatprep.subr.mxu0 0.0
        %1065 = vmatpush2.msra.mxu0 0.0
        %1066 = vmatprep.subr.mxu0 0.0
        %1067 = vmatpush2.msra.mxu0 0.0
        %1068 = vmatprep.subr.mxu0 0.0
        %1069 = vmatpush2.msra.mxu0 0.0
        %1070 = vmatprep.subr.mxu0 0.0
        %1071 = vmatpush2.msra.mxu0 0.0
        %1072 = vmatprep.subr.mxu0 0.0
        %1073 = vmatpush2.msra.mxu0 0.0
        %1074 = vmatprep.subr.mxu0 0.0
        %1075 = vmatpush2.msra.mxu0 0.0
        %1076 = vmatprep.mubr.f32.mxu0 0.0
        %1077 = vmatmul.mubr.f32.gmra.mxu0 %v986
        %v1078 = vpop.f32.mrf.mxu0
        %v1079 = vadd.f32 0.0, %v1078
        %v1080 = vpop.f32.mrf.mxu0
        %1081 = vmatprep.mubr.f32.mxu0 0.0
        %1082 = vmatmul.mubr.f32.gmra.mxu0 %v989
        %v1083 = vpop.f32.mrf.mxu0
        %v1084 = vadd.f32 0.0, %v1083
        %v1085 = vpop.f32.mrf.mxu0
        %1086 = vmatprep.mubr.f32.mxu0 0.0
        %1087 = vmatmul.mubr.f32.gmra.mxu0 %v992
        %v1088 = vpop.f32.mrf.mxu0
        %v1089 = vadd.f32 0.0, %v1088
        %v1090 = vpop.f32.mrf.mxu0
        %1091 = vmatprep.mubr.f32.mxu0 0.0
        %1092 = vmatmul.mubr.f32.gmra.mxu0 %v995
        %v1093 = vpop.f32.mrf.mxu0
        %v1094 = vadd.f32 0.0, %v1093
        %v1095 = vpop.f32.mrf.mxu0
        %1096 = vmatprep.mubr.f32.mxu0 0.0
        %1097 = vmatmul.mubr.f32.gmra.mxu0 %v998
        %v1098 = vpop.f32.mrf.mxu0
        %v1099 = vadd.f32 0.0, %v1098
        %v1100 = vpop.f32.mrf.mxu0
        %1101 = vmatprep.mubr.f32.mxu0 0.0
        %1102 = vmatmul.mubr.f32.gmra.mxu0 %v1001
        %v1103 = vpop.f32.mrf.mxu0
        %v1104 = vadd.f32 0.0, %v1103
        %v1105 = vpop.f32.mrf.mxu0
        %1106 = vmatprep.mubr.f32.mxu0 0.0
        %1107 = vmatmul.mubr.f32.gmra.mxu0 %v1004
        %v1108 = vpop.f32.mrf.mxu0
        %v1109 = vadd.f32 0.0, %v1108
        %v1110 = vpop.f32.mrf.mxu0
        %1111 = vmatprep.mubr.f32.mxu0 0.0
        %1112 = vmatmul.mubr.f32.gmra.mxu0 %v1007
        %v1113 = vpop.f32.mrf.mxu0
        %v1114 = vadd.f32 0.0, %v1113
        %v1115 = vpop.f32.mrf.mxu0
        %1116 = vdwg.mxu0
        %v1117 = vadd.f32 %v967, %v1079
        %v1118 = vadd.f32 %v968, %v1084
        %v1119 = vadd.f32 %v969, %v1089
        %v1120 = vadd.f32 %v970, %v1094
        %v1121 = vadd.f32 %v971, %v1099
        %v1122 = vadd.f32 %v972, %v1104
        %v1123 = vadd.f32 %v973, %v1109
        %v1124 = vadd.f32 %v974, %v1114
        %v1125 = vld [vmem:[#allocation2 + $0x19] sm:$0xff]
        %v1126 = vld [vmem:[#allocation2 + $0x21] sm:$0xff]
        %v1127 = vld [vmem:[#allocation2 + $0x29] sm:$0xff]
        %v1128 = vld [vmem:[#allocation2 + $0x31] sm:$0xff]
        %v1129 = vld [vmem:[#allocation2 + $0x39] sm:$0xff]
        %v1130 = vld [vmem:[#allocation2 + $0x41] sm:$0xff]
        %v1131 = vld [vmem:[#allocation2 + $0x49] sm:$0xff]
        %v1132 = vld [vmem:[#allocation2 + $0x51] sm:$0xff]
        %s1133 = scalar_lea.vmem %s3, 20
        %v1134 = vld [vmem:[%s1133] sm:$0xf]
        %v1136 = vsel %vm370, %v1125, 0
        %v1139 = vsel %vm370, %v1126, 0
        %v1142 = vsel %vm370, %v1127, 0
        %v1145 = vsel %vm370, %v1128, 0
        %v1148 = vsel %vm370, %v1129, 0
        %v1151 = vsel %vm370, %v1130, 0
        %v1154 = vsel %vm370, %v1131, 0
        %v1157 = vsel %vm370, %v1132, 0
        %v1160 = vsel %vm434, %v1134, 0
        %1162 = vmatprep.subr.mxu0 0.0
        %1163 = vmatpush1.msra.mxu0 0.0
        %1164 = vmatprep.subr.mxu0 0.0
        %1165 = vmatpush1.msra.mxu0 0.0
        %1166 = vmatprep.subr.mxu0 0.0
        %1167 = vmatpush1.msra.mxu0 0.0
        %1168 = vmatprep.subr.mxu0 0.0
        %1169 = vmatpush1.msra.mxu0 0.0
        %1170 = vmatprep.subr.mxu0 0.0
        %1171 = vmatpush1.msra.mxu0 0.0
        %1172 = vmatprep.subr.mxu0 0.0
        %1173 = vmatpush1.msra.mxu0 0.0
        %1174 = vmatprep.subr.mxu0 0.0
        %1175 = vmatpush1.msra.mxu0 0.0
        %1176 = vmatprep.subr.mxu0 0.0
        %1177 = vmatpush1.msra.mxu0 0.0
        %1178 = vmatprep.subr.mxu0 0.0
        %1179 = vmatpush1.msra.mxu0 0.0
        %1180 = vmatprep.subr.mxu0 0.0
        %1181 = vmatpush1.msra.mxu0 0.0
        %1182 = vmatprep.subr.mxu0 0.0
        %1183 = vmatpush1.msra.mxu0 0.0
        %1184 = vmatprep.subr.mxu0 0.0
        %1185 = vmatpush1.msra.mxu0 0.0
        %1186 = vmatprep.subr.mxu0 0.0
        %1187 = vmatpush1.msra.mxu0 0.0
        %1188 = vmatprep.subr.mxu0 0.0
        %1189 = vmatpush1.msra.mxu0 0.0
        %1190 = vmatprep.subr.mxu0 0.0
        %1191 = vmatpush1.msra.mxu0 0.0
        %1192 = vmatprep.subr.mxu0 0.0
        %1193 = vmatpush1.msra.mxu0 %v1160
        %1194 = vmatprep.subr.mxu0 0.0
        %1195 = vmatpush2.msra.mxu0 0.0
        %1196 = vmatprep.subr.mxu0 0.0
        %1197 = vmatpush2.msra.mxu0 0.0
        %1198 = vmatprep.subr.mxu0 0.0
        %1199 = vmatpush2.msra.mxu0 0.0
        %1200 = vmatprep.subr.mxu0 0.0
        %1201 = vmatpush2.msra.mxu0 0.0
        %1202 = vmatprep.subr.mxu0 0.0
        %1203 = vmatpush2.msra.mxu0 0.0
        %1204 = vmatprep.subr.mxu0 0.0
        %1205 = vmatpush2.msra.mxu0 0.0
        %1206 = vmatprep.subr.mxu0 0.0
        %1207 = vmatpush2.msra.mxu0 0.0
        %1208 = vmatprep.subr.mxu0 0.0
        %1209 = vmatpush2.msra.mxu0 0.0
        %1210 = vmatprep.subr.mxu0 0.0
        %1211 = vmatpush2.msra.mxu0 0.0
        %1212 = vmatprep.subr.mxu0 0.0
        %1213 = vmatpush2.msra.mxu0 0.0
        %1214 = vmatprep.subr.mxu0 0.0
        %1215 = vmatpush2.msra.mxu0 0.0
        %1216 = vmatprep.subr.mxu0 0.0
        %1217 = vmatpush2.msra.mxu0 0.0
        %1218 = vmatprep.subr.mxu0 0.0
        %1219 = vmatpush2.msra.mxu0 0.0
        %1220 = vmatprep.subr.mxu0 0.0
        %1221 = vmatpush2.msra.mxu0 0.0
        %1222 = vmatprep.subr.mxu0 0.0
        %1223 = vmatpush2.msra.mxu0 0.0
        %1224 = vmatprep.subr.mxu0 0.0
        %1225 = vmatpush2.msra.mxu0 0.0
        %1226 = vmatprep.mubr.f32.mxu0 0.0
        %1227 = vmatmul.mubr.f32.gmra.mxu0 %v1136
        %v1228 = vpop.f32.mrf.mxu0
        %v1229 = vadd.f32 0.0, %v1228
        %v1230 = vpop.f32.mrf.mxu0
        %1231 = vmatprep.mubr.f32.mxu0 0.0
        %1232 = vmatmul.mubr.f32.gmra.mxu0 %v1139
        %v1233 = vpop.f32.mrf.mxu0
        %v1234 = vadd.f32 0.0, %v1233
        %v1235 = vpop.f32.mrf.mxu0
        %1236 = vmatprep.mubr.f32.mxu0 0.0
        %1237 = vmatmul.mubr.f32.gmra.mxu0 %v1142
        %v1238 = vpop.f32.mrf.mxu0
        %v1239 = vadd.f32 0.0, %v1238
        %v1240 = vpop.f32.mrf.mxu0
        %1241 = vmatprep.mubr.f32.mxu0 0.0
        %1242 = vmatmul.mubr.f32.gmra.mxu0 %v1145
        %v1243 = vpop.f32.mrf.mxu0
        %v1244 = vadd.f32 0.0, %v1243
        %v1245 = vpop.f32.mrf.mxu0
        %1246 = vmatprep.mubr.f32.mxu0 0.0
        %1247 = vmatmul.mubr.f32.gmra.mxu0 %v1148
        %v1248 = vpop.f32.mrf.mxu0
        %v1249 = vadd.f32 0.0, %v1248
        %v1250 = vpop.f32.mrf.mxu0
        %1251 = vmatprep.mubr.f32.mxu0 0.0
        %1252 = vmatmul.mubr.f32.gmra.mxu0 %v1151
        %v1253 = vpop.f32.mrf.mxu0
        %v1254 = vadd.f32 0.0, %v1253
        %v1255 = vpop.f32.mrf.mxu0
        %1256 = vmatprep.mubr.f32.mxu0 0.0
        %1257 = vmatmul.mubr.f32.gmra.mxu0 %v1154
        %v1258 = vpop.f32.mrf.mxu0
        %v1259 = vadd.f32 0.0, %v1258
        %v1260 = vpop.f32.mrf.mxu0
        %1261 = vmatprep.mubr.f32.mxu0 0.0
        %1262 = vmatmul.mubr.f32.gmra.mxu0 %v1157
        %v1263 = vpop.f32.mrf.mxu0
        %v1264 = vadd.f32 0.0, %v1263
        %v1265 = vpop.f32.mrf.mxu0
        %1266 = vdwg.mxu0
        %v1267 = vadd.f32 %v1117, %v1229
        %v1268 = vadd.f32 %v1118, %v1234
        %v1269 = vadd.f32 %v1119, %v1239
        %v1270 = vadd.f32 %v1120, %v1244
        %v1271 = vadd.f32 %v1121, %v1249
        %v1272 = vadd.f32 %v1122, %v1254
        %v1273 = vadd.f32 %v1123, %v1259
        %v1274 = vadd.f32 %v1124, %v1264
        %v1275 = vld [vmem:[#allocation2 + $0x27] sm:$0xff]
        %v1276 = vld [vmem:[#allocation2 + $0x2f] sm:$0xff]
        %v1277 = vld [vmem:[#allocation2 + $0x37] sm:$0xff]
        %v1278 = vld [vmem:[#allocation2 + $0x3f] sm:$0xff]
        %v1279 = vld [vmem:[#allocation2 + $0x47] sm:$0xff]
        %v1280 = vld [vmem:[#allocation2 + $0x4f] sm:$0xff]
        %v1281 = vld [vmem:[#allocation2 + $0x57] sm:$0xff]
        %v1282 = vld [vmem:[#allocation2 + $0x5f] sm:$0xff]
        %s1283 = scalar_lea.vmem %s3, 24
        %v1284 = vld [vmem:[%s1283] sm:$0xf]
        %v1286 = vsel %vm370, %v1275, 0
        %v1289 = vsel %vm370, %v1276, 0
        %v1292 = vsel %vm370, %v1277, 0
        %v1295 = vsel %vm370, %v1278, 0
        %v1298 = vsel %vm370, %v1279, 0
        %v1301 = vsel %vm370, %v1280, 0
        %v1304 = vsel %vm370, %v1281, 0
        %v1307 = vsel %vm370, %v1282, 0
        %v1310 = vsel %vm434, %v1284, 0
        %1312 = vmatprep.subr.mxu0 0.0
        %1313 = vmatpush1.msra.mxu0 0.0
        %1314 = vmatprep.subr.mxu0 0.0
        %1315 = vmatpush1.msra.mxu0 0.0
        %1316 = vmatprep.subr.mxu0 0.0
        %1317 = vmatpush1.msra.mxu0 0.0
        %1318 = vmatprep.subr.mxu0 0.0
        %1319 = vmatpush1.msra.mxu0 0.0
        %1320 = vmatprep.subr.mxu0 0.0
        %1321 = vmatpush1.msra.mxu0 0.0
        %1322 = vmatprep.subr.mxu0 0.0
        %1323 = vmatpush1.msra.mxu0 0.0
        %1324 = vmatprep.subr.mxu0 0.0
        %1325 = vmatpush1.msra.mxu0 0.0
        %1326 = vmatprep.subr.mxu0 0.0
        %1327 = vmatpush1.msra.mxu0 0.0
        %1328 = vmatprep.subr.mxu0 0.0
        %1329 = vmatpush1.msra.mxu0 0.0
        %1330 = vmatprep.subr.mxu0 0.0
        %1331 = vmatpush1.msra.mxu0 0.0
        %1332 = vmatprep.subr.mxu0 0.0
        %1333 = vmatpush1.msra.mxu0 0.0
        %1334 = vmatprep.subr.mxu0 0.0
        %1335 = vmatpush1.msra.mxu0 0.0
        %1336 = vmatprep.subr.mxu0 0.0
        %1337 = vmatpush1.msra.mxu0 0.0
        %1338 = vmatprep.subr.mxu0 0.0
        %1339 = vmatpush1.msra.mxu0 0.0
        %1340 = vmatprep.subr.mxu0 0.0
        %1341 = vmatpush1.msra.mxu0 0.0
        %1342 = vmatprep.subr.mxu0 0.0
        %1343 = vmatpush1.msra.mxu0 %v1310
        %1344 = vmatprep.subr.mxu0 0.0
        %1345 = vmatpush2.msra.mxu0 0.0
        %1346 = vmatprep.subr.mxu0 0.0
        %1347 = vmatpush2.msra.mxu0 0.0
        %1348 = vmatprep.subr.mxu0 0.0
        %1349 = vmatpush2.msra.mxu0 0.0
        %1350 = vmatprep.subr.mxu0 0.0
        %1351 = vmatpush2.msra.mxu0 0.0
        %1352 = vmatprep.subr.mxu0 0.0
        %1353 = vmatpush2.msra.mxu0 0.0
        %1354 = vmatprep.subr.mxu0 0.0
        %1355 = vmatpush2.msra.mxu0 0.0
        %1356 = vmatprep.subr.mxu0 0.0
        %1357 = vmatpush2.msra.mxu0 0.0
        %1358 = vmatprep.subr.mxu0 0.0
        %1359 = vmatpush2.msra.mxu0 0.0
        %1360 = vmatprep.subr.mxu0 0.0
        %1361 = vmatpush2.msra.mxu0 0.0
        %1362 = vmatprep.subr.mxu0 0.0
        %1363 = vmatpush2.msra.mxu0 0.0
        %1364 = vmatprep.subr.mxu0 0.0
        %1365 = vmatpush2.msra.mxu0 0.0
        %1366 = vmatprep.subr.mxu0 0.0
        %1367 = vmatpush2.msra.mxu0 0.0
        %1368 = vmatprep.subr.mxu0 0.0
        %1369 = vmatpush2.msra.mxu0 0.0
        %1370 = vmatprep.subr.mxu0 0.0
        %1371 = vmatpush2.msra.mxu0 0.0
        %1372 = vmatprep.subr.mxu0 0.0
        %1373 = vmatpush2.msra.mxu0 0.0
        %1374 = vmatprep.subr.mxu0 0.0
        %1375 = vmatpush2.msra.mxu0 0.0
        %1376 = vmatprep.mubr.f32.mxu0 0.0
        %1377 = vmatmul.mubr.f32.gmra.mxu0 %v1286
        %v1378 = vpop.f32.mrf.mxu0
        %v1379 = vadd.f32 0.0, %v1378
        %v1380 = vpop.f32.mrf.mxu0
        %1381 = vmatprep.mubr.f32.mxu0 0.0
        %1382 = vmatmul.mubr.f32.gmra.mxu0 %v1289
        %v1383 = vpop.f32.mrf.mxu0
        %v1384 = vadd.f32 0.0, %v1383
        %v1385 = vpop.f32.mrf.mxu0
        %1386 = vmatprep.mubr.f32.mxu0 0.0
        %1387 = vmatmul.mubr.f32.gmra.mxu0 %v1292
        %v1388 = vpop.f32.mrf.mxu0
        %v1389 = vadd.f32 0.0, %v1388
        %v1390 = vpop.f32.mrf.mxu0
        %1391 = vmatprep.mubr.f32.mxu0 0.0
        %1392 = vmatmul.mubr.f32.gmra.mxu0 %v1295
        %v1393 = vpop.f32.mrf.mxu0
        %v1394 = vadd.f32 0.0, %v1393
        %v1395 = vpop.f32.mrf.mxu0
        %1396 = vmatprep.mubr.f32.mxu0 0.0
        %1397 = vmatmul.mubr.f32.gmra.mxu0 %v1298
        %v1398 = vpop.f32.mrf.mxu0
        %v1399 = vadd.f32 0.0, %v1398
        %v1400 = vpop.f32.mrf.mxu0
        %1401 = vmatprep.mubr.f32.mxu0 0.0
        %1402 = vmatmul.mubr.f32.gmra.mxu0 %v1301
        %v1403 = vpop.f32.mrf.mxu0
        %v1404 = vadd.f32 0.0, %v1403
        %v1405 = vpop.f32.mrf.mxu0
        %1406 = vmatprep.mubr.f32.mxu0 0.0
        %1407 = vmatmul.mubr.f32.gmra.mxu0 %v1304
        %v1408 = vpop.f32.mrf.mxu0
        %v1409 = vadd.f32 0.0, %v1408
        %v1410 = vpop.f32.mrf.mxu0
        %1411 = vmatprep.mubr.f32.mxu0 0.0
        %1412 = vmatmul.mubr.f32.gmra.mxu0 %v1307
        %v1413 = vpop.f32.mrf.mxu0
        %v1414 = vadd.f32 0.0, %v1413
        %v1415 = vpop.f32.mrf.mxu0
        %1416 = vdwg.mxu0
        %v1417 = vadd.f32 %v1267, %v1379
        %v1418 = vadd.f32 %v1268, %v1384
        %v1419 = vadd.f32 %v1269, %v1389
        %v1420 = vadd.f32 %v1270, %v1394
        %v1421 = vadd.f32 %v1271, %v1399
        %v1422 = vadd.f32 %v1272, %v1404
        %v1423 = vadd.f32 %v1273, %v1409
        %v1424 = vadd.f32 %v1274, %v1414
        %v1425 = vld [vmem:[#allocation2 + $0x28] sm:$0xff]
        %v1426 = vld [vmem:[#allocation2 + $0x30] sm:$0xff]
        %v1427 = vld [vmem:[#allocation2 + $0x38] sm:$0xff]
        %v1428 = vld [vmem:[#allocation2 + $0x40] sm:$0xff]
        %v1429 = vld [vmem:[#allocation2 + $0x48] sm:$0xff]
        %v1430 = vld [vmem:[#allocation2 + $0x50] sm:$0xff]
        %v1431 = vld [vmem:[#allocation2 + $0x58] sm:$0xff]
        %v1432 = vld [vmem:[#allocation2 + $0x60] sm:$0xff]
        %s1433 = scalar_lea.vmem %s3, 28
        %v1434 = vld [vmem:[%s1433] sm:$0xf]
        %v1436 = vsel %vm370, %v1425, 0
        %v1439 = vsel %vm370, %v1426, 0
        %v1442 = vsel %vm370, %v1427, 0
        %v1445 = vsel %vm370, %v1428, 0
        %v1448 = vsel %vm370, %v1429, 0
        %v1451 = vsel %vm370, %v1430, 0
        %v1454 = vsel %vm370, %v1431, 0
        %v1457 = vsel %vm370, %v1432, 0
        %v1460 = vsel %vm434, %v1434, 0
        %1462 = vmatprep.subr.mxu0 0.0
        %1463 = vmatpush1.msra.mxu0 0.0
        %1464 = vmatprep.subr.mxu0 0.0
        %1465 = vmatpush1.msra.mxu0 0.0
        %1466 = vmatprep.subr.mxu0 0.0
        %1467 = vmatpush1.msra.mxu0 0.0
        %1468 = vmatprep.subr.mxu0 0.0
        %1469 = vmatpush1.msra.mxu0 0.0
        %1470 = vmatprep.subr.mxu0 0.0
        %1471 = vmatpush1.msra.mxu0 0.0
        %1472 = vmatprep.subr.mxu0 0.0
        %1473 = vmatpush1.msra.mxu0 0.0
        %1474 = vmatprep.subr.mxu0 0.0
        %1475 = vmatpush1.msra.mxu0 0.0
        %1476 = vmatprep.subr.mxu0 0.0
        %1477 = vmatpush1.msra.mxu0 0.0
        %1478 = vmatprep.subr.mxu0 0.0
        %1479 = vmatpush1.msra.mxu0 0.0
        %1480 = vmatprep.subr.mxu0 0.0
        %1481 = vmatpush1.msra.mxu0 0.0
        %1482 = vmatprep.subr.mxu0 0.0
        %1483 = vmatpush1.msra.mxu0 0.0
        %1484 = vmatprep.subr.mxu0 0.0
        %1485 = vmatpush1.msra.mxu0 0.0
        %1486 = vmatprep.subr.mxu0 0.0
        %1487 = vmatpush1.msra.mxu0 0.0
        %1488 = vmatprep.subr.mxu0 0.0
        %1489 = vmatpush1.msra.mxu0 0.0
        %1490 = vmatprep.subr.mxu0 0.0
        %1491 = vmatpush1.msra.mxu0 0.0
        %1492 = vmatprep.subr.mxu0 0.0
        %1493 = vmatpush1.msra.mxu0 %v1460
        %1494 = vmatprep.subr.mxu0 0.0
        %1495 = vmatpush2.msra.mxu0 0.0
        %1496 = vmatprep.subr.mxu0 0.0
        %1497 = vmatpush2.msra.mxu0 0.0
        %1498 = vmatprep.subr.mxu0 0.0
        %1499 = vmatpush2.msra.mxu0 0.0
        %1500 = vmatprep.subr.mxu0 0.0
        %1501 = vmatpush2.msra.mxu0 0.0
        %1502 = vmatprep.subr.mxu0 0.0
        %1503 = vmatpush2.msra.mxu0 0.0
        %1504 = vmatprep.subr.mxu0 0.0
        %1505 = vmatpush2.msra.mxu0 0.0
        %1506 = vmatprep.subr.mxu0 0.0
        %1507 = vmatpush2.msra.mxu0 0.0
        %1508 = vmatprep.subr.mxu0 0.0
        %1509 = vmatpush2.msra.mxu0 0.0
        %1510 = vmatprep.subr.mxu0 0.0
        %1511 = vmatpush2.msra.mxu0 0.0
        %1512 = vmatprep.subr.mxu0 0.0
        %1513 = vmatpush2.msra.mxu0 0.0
        %1514 = vmatprep.subr.mxu0 0.0
        %1515 = vmatpush2.msra.mxu0 0.0
        %1516 = vmatprep.subr.mxu0 0.0
        %1517 = vmatpush2.msra.mxu0 0.0
        %1518 = vmatprep.subr.mxu0 0.0
        %1519 = vmatpush2.msra.mxu0 0.0
        %1520 = vmatprep.subr.mxu0 0.0
        %1521 = vmatpush2.msra.mxu0 0.0
        %1522 = vmatprep.subr.mxu0 0.0
        %1523 = vmatpush2.msra.mxu0 0.0
        %1524 = vmatprep.subr.mxu0 0.0
        %1525 = vmatpush2.msra.mxu0 0.0
        %1526 = vmatprep.mubr.f32.mxu0 0.0
        %1527 = vmatmul.mubr.f32.gmra.mxu0 %v1436
        %v1528 = vpop.f32.mrf.mxu0
        %v1529 = vadd.f32 0.0, %v1528
        %v1530 = vpop.f32.mrf.mxu0
        %1531 = vmatprep.mubr.f32.mxu0 0.0
        %1532 = vmatmul.mubr.f32.gmra.mxu0 %v1439
        %v1533 = vpop.f32.mrf.mxu0
        %v1534 = vadd.f32 0.0, %v1533
        %v1535 = vpop.f32.mrf.mxu0
        %1536 = vmatprep.mubr.f32.mxu0 0.0
        %1537 = vmatmul.mubr.f32.gmra.mxu0 %v1442
        %v1538 = vpop.f32.mrf.mxu0
        %v1539 = vadd.f32 0.0, %v1538
        %v1540 = vpop.f32.mrf.mxu0
        %1541 = vmatprep.mubr.f32.mxu0 0.0
        %1542 = vmatmul.mubr.f32.gmra.mxu0 %v1445
        %v1543 = vpop.f32.mrf.mxu0
        %v1544 = vadd.f32 0.0, %v1543
        %v1545 = vpop.f32.mrf.mxu0
        %1546 = vmatprep.mubr.f32.mxu0 0.0
        %1547 = vmatmul.mubr.f32.gmra.mxu0 %v1448
        %v1548 = vpop.f32.mrf.mxu0
        %v1549 = vadd.f32 0.0, %v1548
        %v1550 = vpop.f32.mrf.mxu0
        %1551 = vmatprep.mubr.f32.mxu0 0.0
        %1552 = vmatmul.mubr.f32.gmra.mxu0 %v1451
        %v1553 = vpop.f32.mrf.mxu0
        %v1554 = vadd.f32 0.0, %v1553
        %v1555 = vpop.f32.mrf.mxu0
        %1556 = vmatprep.mubr.f32.mxu0 0.0
        %1557 = vmatmul.mubr.f32.gmra.mxu0 %v1454
        %v1558 = vpop.f32.mrf.mxu0
        %v1559 = vadd.f32 0.0, %v1558
        %v1560 = vpop.f32.mrf.mxu0
        %1561 = vmatprep.mubr.f32.mxu0 0.0
        %1562 = vmatmul.mubr.f32.gmra.mxu0 %v1457
        %v1563 = vpop.f32.mrf.mxu0
        %v1564 = vadd.f32 0.0, %v1563
        %v1565 = vpop.f32.mrf.mxu0
        %1566 = vdwg.mxu0
        %v1567 = vadd.f32 %v1417, %v1529
        %v1568 = vadd.f32 %v1418, %v1534
        %v1569 = vadd.f32 %v1419, %v1539
        %v1570 = vadd.f32 %v1420, %v1544
        %v1571 = vadd.f32 %v1421, %v1549
        %v1572 = vadd.f32 %v1422, %v1554
        %v1573 = vadd.f32 %v1423, %v1559
        %v1574 = vadd.f32 %v1424, %v1564
        %v1575 = vld [vmem:[#allocation2 + $0x29] sm:$0xff]
        %v1576 = vld [vmem:[#allocation2 + $0x31] sm:$0xff]
        %v1577 = vld [vmem:[#allocation2 + $0x39] sm:$0xff]
        %v1578 = vld [vmem:[#allocation2 + $0x41] sm:$0xff]
        %v1579 = vld [vmem:[#allocation2 + $0x49] sm:$0xff]
        %v1580 = vld [vmem:[#allocation2 + $0x51] sm:$0xff]
        %v1581 = vld [vmem:[#allocation2 + $0x59] sm:$0xff]
        %v1582 = vld [vmem:[#allocation2 + $0x61] sm:$0xff]
        %s1583 = scalar_lea.vmem %s3, 32
        %v1584 = vld [vmem:[%s1583] sm:$0xf]
        %v1586 = vsel %vm370, %v1575, 0
        %v1589 = vsel %vm370, %v1576, 0
        %v1592 = vsel %vm370, %v1577, 0
        %v1595 = vsel %vm370, %v1578, 0
        %v1598 = vsel %vm370, %v1579, 0
        %v1601 = vsel %vm370, %v1580, 0
        %v1604 = vsel %vm370, %v1581, 0
        %v1607 = vsel %vm370, %v1582, 0
        %v1610 = vsel %vm434, %v1584, 0
        %1612 = vmatprep.subr.mxu0 0.0
        %1613 = vmatpush1.msra.mxu0 0.0
        %1614 = vmatprep.subr.mxu0 0.0
        %1615 = vmatpush1.msra.mxu0 0.0
        %1616 = vmatprep.subr.mxu0 0.0
        %1617 = vmatpush1.msra.mxu0 0.0
        %1618 = vmatprep.subr.mxu0 0.0
        %1619 = vmatpush1.msra.mxu0 0.0
        %1620 = vmatprep.subr.mxu0 0.0
        %1621 = vmatpush1.msra.mxu0 0.0
        %1622 = vmatprep.subr.mxu0 0.0
        %1623 = vmatpush1.msra.mxu0 0.0
        %1624 = vmatprep.subr.mxu0 0.0
        %1625 = vmatpush1.msra.mxu0 0.0
        %1626 = vmatprep.subr.mxu0 0.0
        %1627 = vmatpush1.msra.mxu0 0.0
        %1628 = vmatprep.subr.mxu0 0.0
        %1629 = vmatpush1.msra.mxu0 0.0
        %1630 = vmatprep.subr.mxu0 0.0
        %1631 = vmatpush1.msra.mxu0 0.0
        %1632 = vmatprep.subr.mxu0 0.0
        %1633 = vmatpush1.msra.mxu0 0.0
        %1634 = vmatprep.subr.mxu0 0.0
        %1635 = vmatpush1.msra.mxu0 0.0
        %1636 = vmatprep.subr.mxu0 0.0
        %1637 = vmatpush1.msra.mxu0 0.0
        %1638 = vmatprep.subr.mxu0 0.0
        %1639 = vmatpush1.msra.mxu0 0.0
        %1640 = vmatprep.subr.mxu0 0.0
        %1641 = vmatpush1.msra.mxu0 0.0
        %1642 = vmatprep.subr.mxu0 0.0
        %1643 = vmatpush1.msra.mxu0 %v1610
        %1644 = vmatprep.subr.mxu0 0.0
        %1645 = vmatpush2.msra.mxu0 0.0
        %1646 = vmatprep.subr.mxu0 0.0
        %1647 = vmatpush2.msra.mxu0 0.0
        %1648 = vmatprep.subr.mxu0 0.0
        %1649 = vmatpush2.msra.mxu0 0.0
        %1650 = vmatprep.subr.mxu0 0.0
        %1651 = vmatpush2.msra.mxu0 0.0
        %1652 = vmatprep.subr.mxu0 0.0
        %1653 = vmatpush2.msra.mxu0 0.0
        %1654 = vmatprep.subr.mxu0 0.0
        %1655 = vmatpush2.msra.mxu0 0.0
        %1656 = vmatprep.subr.mxu0 0.0
        %1657 = vmatpush2.msra.mxu0 0.0
        %1658 = vmatprep.subr.mxu0 0.0
        %1659 = vmatpush2.msra.mxu0 0.0
        %1660 = vmatprep.subr.mxu0 0.0
        %1661 = vmatpush2.msra.mxu0 0.0
        %1662 = vmatprep.subr.mxu0 0.0
        %1663 = vmatpush2.msra.mxu0 0.0
        %1664 = vmatprep.subr.mxu0 0.0
        %1665 = vmatpush2.msra.mxu0 0.0
        %1666 = vmatprep.subr.mxu0 0.0
        %1667 = vmatpush2.msra.mxu0 0.0
        %1668 = vmatprep.subr.mxu0 0.0
        %1669 = vmatpush2.msra.mxu0 0.0
        %1670 = vmatprep.subr.mxu0 0.0
        %1671 = vmatpush2.msra.mxu0 0.0
        %1672 = vmatprep.subr.mxu0 0.0
        %1673 = vmatpush2.msra.mxu0 0.0
        %1674 = vmatprep.subr.mxu0 0.0
        %1675 = vmatpush2.msra.mxu0 0.0
        %1676 = vmatprep.mubr.f32.mxu0 0.0
        %1677 = vmatmul.mubr.f32.gmra.mxu0 %v1586
        %v1678 = vpop.f32.mrf.mxu0
        %v1679 = vadd.f32 0.0, %v1678
        %v1680 = vpop.f32.mrf.mxu0
        %1681 = vmatprep.mubr.f32.mxu0 0.0
        %1682 = vmatmul.mubr.f32.gmra.mxu0 %v1589
        %v1683 = vpop.f32.mrf.mxu0
        %v1684 = vadd.f32 0.0, %v1683
        %v1685 = vpop.f32.mrf.mxu0
        %1686 = vmatprep.mubr.f32.mxu0 0.0
        %1687 = vmatmul.mubr.f32.gmra.mxu0 %v1592
        %v1688 = vpop.f32.mrf.mxu0
        %v1689 = vadd.f32 0.0, %v1688
        %v1690 = vpop.f32.mrf.mxu0
        %1691 = vmatprep.mubr.f32.mxu0 0.0
        %1692 = vmatmul.mubr.f32.gmra.mxu0 %v1595
        %v1693 = vpop.f32.mrf.mxu0
        %v1694 = vadd.f32 0.0, %v1693
        %v1695 = vpop.f32.mrf.mxu0
        %1696 = vmatprep.mubr.f32.mxu0 0.0
        %1697 = vmatmul.mubr.f32.gmra.mxu0 %v1598
        %v1698 = vpop.f32.mrf.mxu0
        %v1699 = vadd.f32 0.0, %v1698
        %v1700 = vpop.f32.mrf.mxu0
        %1701 = vmatprep.mubr.f32.mxu0 0.0
        %1702 = vmatmul.mubr.f32.gmra.mxu0 %v1601
        %v1703 = vpop.f32.mrf.mxu0
        %v1704 = vadd.f32 0.0, %v1703
        %v1705 = vpop.f32.mrf.mxu0
        %1706 = vmatprep.mubr.f32.mxu0 0.0
        %1707 = vmatmul.mubr.f32.gmra.mxu0 %v1604
        %v1708 = vpop.f32.mrf.mxu0
        %v1709 = vadd.f32 0.0, %v1708
        %v1710 = vpop.f32.mrf.mxu0
        %1711 = vmatprep.mubr.f32.mxu0 0.0
        %1712 = vmatmul.mubr.f32.gmra.mxu0 %v1607
        %v1713 = vpop.f32.mrf.mxu0
        %v1714 = vadd.f32 0.0, %v1713
        %v1715 = vpop.f32.mrf.mxu0
        %1716 = vdwg.mxu0
        %v1717 = vadd.f32 %v1567, %v1679
        %v1718 = vadd.f32 %v1568, %v1684
        %v1719 = vadd.f32 %v1569, %v1689
        %v1720 = vadd.f32 %v1570, %v1694
        %v1721 = vadd.f32 %v1571, %v1699
        %v1722 = vadd.f32 %v1572, %v1704
        %v1723 = vadd.f32 %v1573, %v1709
        %v1724 = vadd.f32 %v1574, %v1714
        %1725 = vst [vmem:[%s307] sm:$0xff] %v1717
        %1726 = vst [vmem:[%s307 + $0x8] sm:$0xff] %v1718
        %1727 = vst [vmem:[%s307 + $0x10] sm:$0xff] %v1719
        %1728 = vst [vmem:[%s307 + $0x18] sm:$0xff] %v1720
        %1729 = vst [vmem:[%s307 + $0x20] sm:$0xff] %v1721
        %1730 = vst [vmem:[%s307 + $0x28] sm:$0xff] %v1722
        %1731 = vst [vmem:[%s307 + $0x30] sm:$0xff] %v1723
        %1732 = vst [vmem:[%s307 + $0x38] sm:$0xff] %v1724
        %s1733 = sand.u32 %s161, 1
        %s1734 = scalar_lea.sflag [#allocation4], %s1733
        %s1735 = sand.u32 %s161, 1
        %s1736 = smul.addr %s1735, 64
        %s1737 = scalar_lea.vmem [#allocation3], %s1736
        // Predicated region
        $region37: #{tpu_custom_call.1} parent=35 // pred_check
          %p1738 = pneg %p171
        $region38: #{tpu_custom_call.1} parent=35 // pred_check_branch
          %1740 = sbr.rel (%p1738) target = $region40
        $region39: #{tpu_custom_call.1} parent=35 // pred_region
          %s1741 = smul.u32 4, %s23
          %s1743 = ssub.s32 1024, 1024
          %1744 = vsyncadd %s1734, %s1743
          %s1745 = smul.addr %s1741, 2
          %s1746 = smul.addr %s22, 32
          %s1747 = sadd.s32 %s1745, %s1746
          %s1748 = smul.addr %s1747, 128
          %s1749 = scalar_lea.hbm %s4, %s1748
          %s1750 = sshll.u32 %s1737, 4
          %s1751 = int_to_ptr.vmem [resolvable:$true] %s1750
          %1756 = dma.vmem_to_hbm [thread:$0]  %s1751, 1024, %s1749, %s1734, 128, 128, 8
        $region40: #{tpu_custom_call.1} parent=35 // pred_fallthru
          _
      $region36: #{tpu_custom_call.1} parent=5 // pred_fallthru
        _
      %p1757 = scmp.le.s32.totalorder 2, %s13
      // Predicated region
      $region41: #{tpu_custom_call.1} parent=5 // pred_check
        %p1758 = pneg %p1757
      $region42: #{tpu_custom_call.1} parent=5 // pred_check_branch
        %1760 = sbr.rel (%p1758) target = $region44
      $region43: #{tpu_custom_call.1} parent=5 // pred_region
        %s1761 = ssub.s32 %s13, 2
        // Predicated region
        $region45: #{tpu_custom_call.1} parent=43 // pred_check
          %p1762 = pneg %p177
        $region46: #{tpu_custom_call.1} parent=43 // pred_check_branch
          %1764 = sbr.rel (%p1762) target = $region48
        $region47: #{tpu_custom_call.1} parent=43 // pred_region
          %s1765 = sand.u32 %s162, 1
          %s1766 = scalar_lea.sflag [#allocation4], %s1765
          %s1767 = sand.u32 %s162, 1
          %s1768 = smul.addr %s1767, 64
          %s1769 = scalar_lea.vmem [#allocation3], %s1768
          %1770 = dma.done %s1766, 1024
        $region48: #{tpu_custom_call.1} parent=43 // pred_fallthru
          _
      $region44: #{tpu_custom_call.1} parent=5 // pred_fallthru
        _
    $region6: #{tpu_custom_call.1} parent=1 // loop_footer
      %s17 = sadd.s32 1, %s13
    $region7: #{tpu_custom_call.1} parent=1 // loop_footer_branch
      %12 = sbr.rel target = $region3
    $region8: #{tpu_custom_call.1} parent=1 // loop_exit
      _
    %1771 = vsyncpa [#allocation4], 1
    %s1772 = scalar_lea.sflag [#allocation4], 1
    %1773 = vsyncpa %s1772, 1

</llo_original>
